<compile_context>
chip_gen: v6e
topology: v6e:2x2x1
jax: 0.10.0
libtpu: 0.0.40
codegen_flags: <defaults>
</compile_context>

<pallas_src>
import functools

import jax
import jax.numpy as jnp
from jax.experimental import pallas as pl
from jax.experimental.pallas import tpu as pltpu


def _embedding_kernel(x_ref, o_ref, *, freq_bands, c):
    # x_ref: (c, tile_n)   o_ref: (c * (2*F + 1), tile_n)  -- N is lane-dense.
    x = x_ref[...]
    # Identity term.
    o_ref[0:c, :] = x.astype(o_ref.dtype)
    # freq_bands are static Python floats -> loop unrolled at trace time.
    for k, f in enumerate(freq_bands):
        fx = f * x
        o_ref[(1 + 2 * k) * c:(2 + 2 * k) * c, :] = jnp.sin(fx).astype(o_ref.dtype)
        o_ref[(2 + 2 * k) * c:(3 + 2 * k) * c, :] = jnp.cos(fx).astype(o_ref.dtype)


def embedding_forward(x, num_freqs, logscale=True, *, tile_n=512, out_dtype=None):
    """Pallas equivalent of Embedding.forward for 2-D input (N, C).

    tile_n: rows processed per grid step (must be a multiple of 128). N is
    padded up to a multiple of tile_n internally and the padding is sliced off.
    """
    n, c = x.shape
    out_dtype = x.dtype if out_dtype is None else out_dtype

    if logscale:
        freq_bands = [float(2.0 ** i) for i in range(num_freqs)]
    else:
        freq_bands = [float(v) for v in
                      jnp.linspace(1.0, 2.0 ** (num_freqs - 1), num_freqs).tolist()]
    out_channels = c * (2 * num_freqs + 1)

    assert tile_n % 128 == 0, "tile_n must be a multiple of 128 (lane width)"

    # Channels-first, lane-dense layout: (C, N_pad).
    n_pad = pl.cdiv(n, tile_n) * tile_n
    xt = x.T
    if n_pad != n:
        xt = jnp.pad(xt, ((0, 0), (0, n_pad - n)))

    kernel = functools.partial(_embedding_kernel, freq_bands=freq_bands, c=c)

    out_t = pl.pallas_call(
        kernel,
        out_shape=jax.ShapeDtypeStruct((out_channels, n_pad), out_dtype),
        grid_spec=pltpu.PrefetchScalarGridSpec(
            num_scalar_prefetch=0,
            grid=(n_pad // tile_n,),
            # Block first dims equal the full array dims (c and out_channels),
            # last dim is a multiple of 128 -> satisfies the (8,128) rule.
            in_specs=[pl.BlockSpec((c, tile_n), lambda i: (0, i))],
            out_specs=pl.BlockSpec((out_channels, tile_n), lambda i: (0, i)),
        ),
        compiler_params=pltpu.CompilerParams(
            dimension_semantics=("parallel",),   # shards across TCs on v7x
            vmem_limit_bytes=32 * 1024 * 1024,   # tiny tiles; plenty of headroom
        ),
    )(xt)

    # Back to the PyTorch module's (N, out_channels) interleaved layout.
    return out_t[:, :n].T


def embedding_reference(x, num_freqs, logscale=True):
    """Pure-JAX reference mirroring the PyTorch forward()."""
    if logscale:
        freq_bands = 2.0 ** jnp.linspace(0.0, num_freqs - 1, num_freqs)
    else:
        freq_bands = jnp.linspace(1.0, 2.0 ** (num_freqs - 1), num_freqs)
    out = [x]
    for f in freq_bands:
        for func in (jnp.sin, jnp.cos):
            out.append(func(f * x))
    return jnp.concatenate(out, axis=-1)


if __name__ == "__main__":
    # Small NeRF-like configuration: 3 input channels (xyz), 6 frequencies.
    in_channels = 3
    num_freqs = 6
    n_points = 2048  # rows; tile_n=512 -> grid of 4 pipelined steps

    key = jax.random.PRNGKey(0)
    x = jax.random.uniform(
        key, (n_points, in_channels), dtype=jnp.float32, minval=-1.0, maxval=1.0
    )

    out = embedding_forward(x, num_freqs, logscale=True, tile_n=512)
    out = jax.block_until_ready(out)

    ref = embedding_reference(x, num_freqs, logscale=True)

    expected_shape = (n_points, in_channels * (2 * num_freqs + 1))
    assert out.shape == expected_shape, (out.shape, expected_shape)
    assert jnp.allclose(out, ref, atol=1e-5, rtol=1e-5), "mismatch vs reference"

    # Also exercise a ragged N (padding path).
    x2 = jax.random.uniform(jax.random.PRNGKey(1), (1000, in_channels),
                            dtype=jnp.float32, minval=-1.0, maxval=1.0)
    out2 = jax.block_until_ready(embedding_forward(x2, num_freqs, tile_n=256))
    ref2 = embedding_reference(x2, num_freqs)
    assert out2.shape == (1000, in_channels * (2 * num_freqs + 1))
    assert jnp.allclose(out2, ref2, atol=1e-5, rtol=1e-5), "ragged mismatch"

    print("KERNEL_OK")
</pallas_src>

<mosaic_0001>
module attributes {stable_mosaic.version = 11 : i64} {
  func.func @_embedding_kernel(%arg0: i32, %arg1: memref<3x512xf32, #tpu.memory_space<vmem>>, %arg2: memref<39x512xf32, #tpu.memory_space<vmem>>) attributes {dimension_semantics = [#tpu.dimension_semantics<parallel>], iteration_bounds = array<i64: 4>, scalar_prefetch = 0 : i64, scratch_operands = 0 : i64, tpu.core_type = #tpu.core_type<tc>, window_params = [{transform_indices = @transform_0, window_bounds = array<i64: 3, 512>}, {transform_indices = @transform_1, window_bounds = array<i64: 39, 512>}]} {
    %c0 = arith.constant 0 : index
    %c0_0 = arith.constant 0 : index
    %0 = vector.load %arg1[%c0, %c0_0] : memref<3x512xf32, #tpu.memory_space<vmem>>, vector<3x512xf32>
    %c0_1 = arith.constant 0 : index
    %c0_2 = arith.constant 0 : index
    %1 = vector.load %arg2[%c0_1, %c0_2] : memref<39x512xf32, #tpu.memory_space<vmem>>, vector<3x512xf32>
    tpu.vector_store %arg2[%c0_1, %c0_2], %0 {strides = array<i32>} : memref<39x512xf32, #tpu.memory_space<vmem>>, vector<3x512xf32>,
    %cst = arith.constant 1.000000e+00 : f32
    %2 = vector.broadcast %cst : f32 to vector<3x512xf32>
    %3 = arith.mulf %2, %0 : vector<3x512xf32>
    %4 = math.sin %3 : vector<3x512xf32>
    %c3 = arith.constant 3 : index
    %c0_3 = arith.constant 0 : index
    %5 = vector.load %arg2[%c3, %c0_3] : memref<39x512xf32, #tpu.memory_space<vmem>>, vector<3x512xf32>
    tpu.vector_store %arg2[%c3, %c0_3], %4 {strides = array<i32>} : memref<39x512xf32, #tpu.memory_space<vmem>>, vector<3x512xf32>,
    %6 = math.cos %3 : vector<3x512xf32>
    %c6 = arith.constant 6 : index
    %c0_4 = arith.constant 0 : index
    %7 = vector.load %arg2[%c6, %c0_4] : memref<39x512xf32, #tpu.memory_space<vmem>>, vector<3x512xf32>
    tpu.vector_store %arg2[%c6, %c0_4], %6 {strides = array<i32>} : memref<39x512xf32, #tpu.memory_space<vmem>>, vector<3x512xf32>,
    %cst_5 = arith.constant 2.000000e+00 : f32
    %8 = vector.broadcast %cst_5 : f32 to vector<3x512xf32>
    %9 = arith.mulf %8, %0 : vector<3x512xf32>
    %10 = math.sin %9 : vector<3x512xf32>
    %c9 = arith.constant 9 : index
    %c0_6 = arith.constant 0 : index
    %11 = vector.load %arg2[%c9, %c0_6] : memref<39x512xf32, #tpu.memory_space<vmem>>, vector<3x512xf32>
    tpu.vector_store %arg2[%c9, %c0_6], %10 {strides = array<i32>} : memref<39x512xf32, #tpu.memory_space<vmem>>, vector<3x512xf32>,
    %12 = math.cos %9 : vector<3x512xf32>
    %c12 = arith.constant 12 : index
    %c0_7 = arith.constant 0 : index
    %13 = vector.load %arg2[%c12, %c0_7] : memref<39x512xf32, #tpu.memory_space<vmem>>, vector<3x512xf32>
    tpu.vector_store %arg2[%c12, %c0_7], %12 {strides = array<i32>} : memref<39x512xf32, #tpu.memory_space<vmem>>, vector<3x512xf32>,
    %cst_8 = arith.constant 4.000000e+00 : f32
    %14 = vector.broadcast %cst_8 : f32 to vector<3x512xf32>
    %15 = arith.mulf %14, %0 : vector<3x512xf32>
    %16 = math.sin %15 : vector<3x512xf32>
    %c15 = arith.constant 15 : index
    %c0_9 = arith.constant 0 : index
    %17 = vector.load %arg2[%c15, %c0_9] : memref<39x512xf32, #tpu.memory_space<vmem>>, vector<3x512xf32>
    tpu.vector_store %arg2[%c15, %c0_9], %16 {strides = array<i32>} : memref<39x512xf32, #tpu.memory_space<vmem>>, vector<3x512xf32>,
    %18 = math.cos %15 : vector<3x512xf32>
    %c18 = arith.constant 18 : index
    %c0_10 = arith.constant 0 : index
    %19 = vector.load %arg2[%c18, %c0_10] : memref<39x512xf32, #tpu.memory_space<vmem>>, vector<3x512xf32>
    tpu.vector_store %arg2[%c18, %c0_10], %18 {strides = array<i32>} : memref<39x512xf32, #tpu.memory_space<vmem>>, vector<3x512xf32>,
    %cst_11 = arith.constant 8.000000e+00 : f32
    %20 = vector.broadcast %cst_11 : f32 to vector<3x512xf32>
    %21 = arith.mulf %20, %0 : vector<3x512xf32>
    %22 = math.sin %21 : vector<3x512xf32>
    %c21 = arith.constant 21 : index
    %c0_12 = arith.constant 0 : index
    %23 = vector.load %arg2[%c21, %c0_12] : memref<39x512xf32, #tpu.memory_space<vmem>>, vector<3x512xf32>
    tpu.vector_store %arg2[%c21, %c0_12], %22 {strides = array<i32>} : memref<39x512xf32, #tpu.memory_space<vmem>>, vector<3x512xf32>,
    %24 = math.cos %21 : vector<3x512xf32>
    %c24 = arith.constant 24 : index
    %c0_13 = arith.constant 0 : index
    %25 = vector.load %arg2[%c24, %c0_13] : memref<39x512xf32, #tpu.memory_space<vmem>>, vector<3x512xf32>
    tpu.vector_store %arg2[%c24, %c0_13], %24 {strides = array<i32>} : memref<39x512xf32, #tpu.memory_space<vmem>>, vector<3x512xf32>,
    %cst_14 = arith.constant 1.600000e+01 : f32
    %26 = vector.broadcast %cst_14 : f32 to vector<3x512xf32>
    %27 = arith.mulf %26, %0 : vector<3x512xf32>
    %28 = math.sin %27 : vector<3x512xf32>
    %c27 = arith.constant 27 : index
    %c0_15 = arith.constant 0 : index
    %29 = vector.load %arg2[%c27, %c0_15] : memref<39x512xf32, #tpu.memory_space<vmem>>, vector<3x512xf32>
    tpu.vector_store %arg2[%c27, %c0_15], %28 {strides = array<i32>} : memref<39x512xf32, #tpu.memory_space<vmem>>, vector<3x512xf32>,
    %30 = math.cos %27 : vector<3x512xf32>
    %c30 = arith.constant 30 : index
    %c0_16 = arith.constant 0 : index
    %31 = vector.load %arg2[%c30, %c0_16] : memref<39x512xf32, #tpu.memory_space<vmem>>, vector<3x512xf32>
    tpu.vector_store %arg2[%c30, %c0_16], %30 {strides = array<i32>} : memref<39x512xf32, #tpu.memory_space<vmem>>, vector<3x512xf32>,
    %cst_17 = arith.constant 3.200000e+01 : f32
    %32 = vector.broadcast %cst_17 : f32 to vector<3x512xf32>
    %33 = arith.mulf %32, %0 : vector<3x512xf32>
    %34 = math.sin %33 : vector<3x512xf32>
    %c33 = arith.constant 33 : index
    %c0_18 = arith.constant 0 : index
    %35 = vector.load %arg2[%c33, %c0_18] : memref<39x512xf32, #tpu.memory_space<vmem>>, vector<3x512xf32>
    tpu.vector_store %arg2[%c33, %c0_18], %34 {strides = array<i32>} : memref<39x512xf32, #tpu.memory_space<vmem>>, vector<3x512xf32>,
    %36 = math.cos %33 : vector<3x512xf32>
    %c36 = arith.constant 36 : index
    %c0_19 = arith.constant 0 : index
    %37 = vector.load %arg2[%c36, %c0_19] : memref<39x512xf32, #tpu.memory_space<vmem>>, vector<3x512xf32>
    tpu.vector_store %arg2[%c36, %c0_19], %36 {strides = array<i32>} : memref<39x512xf32, #tpu.memory_space<vmem>>, vector<3x512xf32>,
    return
  }
  func.func @transform_0(%arg0: i32) -> (i32, i32) {
    %c0_i32 = arith.constant 0 : i32
    %c0_i32_0 = arith.constant 0 : i32
    return %c0_i32, %arg0 : i32, i32
  }
  func.func @transform_1(%arg0: i32) -> (i32, i32) {
    %c0_i32 = arith.constant 0 : i32
    %c0_i32_0 = arith.constant 0 : i32
    return %c0_i32, %arg0 : i32, i32
  }
}

</mosaic_0001>

<llo_original>
// kernel: tpu_custom_call.1
$region0: #{tpu_custom_call.1}
  #allocation0 [shape = 'u32[]', space=smem, size = 0x4, offset = 0x4, fixed_abs, tag = 'smem constant byte address 0x4 - core index']
  #allocation1 [shape = 'u32[144,128]{1,0:T(1,128)}', space=vmem, size = 0x12000, scoped, tag = 'internal scratch']
  %s0 = inlined_call_operand.hbm [shape: f32[3,2048], index: 0, kind: input, shape index: {}]
  %s1 = inlined_call_operand.hbm [shape: f32[39,2048], index: 1, kind: output, shape index: {}]
  %s2 = sld [smem:[#allocation0]]
  $region41: #{tpu_custom_call.1} parent=0
    _
  %s4 = ssub.s32 1, %s2
  %s5 = scalar_select 0, %s4, %s2
  $region1: #{tpu_custom_call.1} parent=0
    #allocation2 [shape = 'u8[16384]{0}', space=vmem, size = 0x4000, scoped, tag = 'input window, operand 0']
    #allocation3 [shape = 's32[2]{0}', space=sflag, size = 0x8, scoped, tag = 'scoped memory for tpu_custom_call.1']
    #allocation4 [shape = 's32[2]{0}', space=sflag, size = 0x8, scoped, tag = 'scoped memory for tpu_custom_call.1']
    #allocation5 [shape = 'u8[163840]{0}', space=vmem, size = 0x28000, scoped, tag = 'output window, operand 0']
    %6 = vsyncpa [#allocation3], 0
    %s7 = scalar_lea.sflag [#allocation3], 1
    %8 = vsyncpa %s7, 0
    %9 = vsyncpa [#allocation4], 0
    %s10 = scalar_lea.sflag [#allocation4], 1
    %11 = vsyncpa %s10, 0
    loop: start=0, step=1, limit=6
    $region2: #{tpu_custom_call.1} parent=1 // loop_pre_header
      _
    $region3: #{tpu_custom_call.1} parent=1 // loop_header
      %s13 = sphi 0, %s17
      %p14 = scmp.ge.s32.totalorder %s13, 6
      %s23 = sphi 0, %s25
      %s26 = sphi 0, %s23
      %s27 = sphi 0, %s26
      %s43 = sphi 0, %s27
      %s49 = sphi 0, %s51
      %s52 = sphi 0, %s49
      %s53 = sphi 0, %s52
      %s69 = sphi 0, %s53
    $region4: #{tpu_custom_call.1} parent=1 // loop_header_branch
      %16 = sbr.rel (%p14) target = $region8
    $region5: #{tpu_custom_call.1} parent=1 // loop_body
      %s18 = ssub.s32 %s13, 1
      %s19 = ssub.s32 %s13, 2
      %s20 = sadd.s32 %s13, 1
      %s21 = ssub.s32 %s13, %s20
      %p22 = scmp.eq.s32.totalorder %s21, 0
      %s24 = sadd.s32 %s23, 1
      %s25 = scalar_select %p22, %s23, %s24
      %p28 = pneg %p22
      %p29 = scmp.eq.s32.totalorder %s13, 3
      %p30 = por %p28, %p29
      %p31 = scmp.ne.s32.totalorder %s23, %s26
      %p32 = scmp.eq.s32.totalorder %s13, 0
      %p33 = por %p31, %p32
      %p34 = scmp.ne.s32.totalorder %s23, %s26
      %p35 = scmp.eq.s32.totalorder %s18, 3
      %p36 = por %p34, %p35
      %p37 = scmp.ne.s32.totalorder %s26, %s27
      %p38 = scmp.eq.s32.totalorder %s18, 0
      %p39 = por %p37, %p38
      %p40 = scmp.ne.s32.totalorder %s26, %s27
      %p41 = scmp.eq.s32.totalorder %s19, 3
      %p42 = por %p40, %p41
      %p44 = scmp.ne.s32.totalorder %s27, %s43
      %p45 = scmp.eq.s32.totalorder %s19, 0
      %p46 = por %p44, %p45
      %s47 = ssub.s32 %s13, %s20
      %p48 = scmp.eq.s32.totalorder %s47, 0
      %s50 = sadd.s32 %s49, 1
      %s51 = scalar_select %p48, %s49, %s50
      %p54 = pneg %p48
      %p55 = scmp.eq.s32.totalorder %s13, 3
      %p56 = por %p54, %p55
      %p57 = scmp.ne.s32.totalorder %s49, %s52
      %p58 = scmp.eq.s32.totalorder %s13, 0
      %p59 = por %p57, %p58
      %p60 = scmp.ne.s32.totalorder %s49, %s52
      %p61 = scmp.eq.s32.totalorder %s18, 3
      %p62 = por %p60, %p61
      %p63 = scmp.ne.s32.totalorder %s52, %s53
      %p64 = scmp.eq.s32.totalorder %s18, 0
      %p65 = por %p63, %p64
      %p66 = scmp.ne.s32.totalorder %s52, %s53
      %p67 = scmp.eq.s32.totalorder %s19, 3
      %p68 = por %p66, %p67
      %p70 = scmp.ne.s32.totalorder %s53, %s69
      %p71 = scmp.eq.s32.totalorder %s19, 0
      %p72 = por %p70, %p71
      %p73 = scmp.le.s32.totalorder 1, %s13
      %p74 = scmp.lt.s32.totalorder %s13, 5
      %p75 = pnand %p73, %p74
      %p76 = pneg %p75
      // Predicated region
      $region9: #{tpu_custom_call.1} parent=5 // pred_check
        _
      $region10: #{tpu_custom_call.1} parent=5 // pred_check_branch
        %78 = sbr.rel (%p75) target = $region12
      $region11: #{tpu_custom_call.1} parent=5 // pred_region
        %s79 = ssub.s32 %s13, 1
      $region12: #{tpu_custom_call.1} parent=5 // pred_fallthru
        _
      %p80 = scmp.lt.s32.totalorder %s13, 4
      // Predicated region
      $region13: #{tpu_custom_call.1} parent=5 // pred_check
        %p81 = pneg %p80
      $region14: #{tpu_custom_call.1} parent=5 // pred_check_branch
        %83 = sbr.rel (%p81) target = $region16
      $region15: #{tpu_custom_call.1} parent=5 // pred_region
        // Predicated region
        $region17: #{tpu_custom_call.1} parent=15 // pred_check
          %p84 = pneg %p33
        $region18: #{tpu_custom_call.1} parent=15 // pred_check_branch
          %86 = sbr.rel (%p84) target = $region20
        $region19: #{tpu_custom_call.1} parent=15 // pred_region
          %s87 = sand.u32 %s23, 1
          %s88 = scalar_lea.sflag [#allocation3], %s87
          %s89 = sand.u32 %s23, 1
          %s90 = smul.addr %s89, 16
          %s91 = scalar_lea.vmem [#allocation2], %s90
          %s92 = smul.u32 4, %s13
          %s94 = ssub.s32 256, 256
          %95 = vsyncadd %s88, %s94
          %s96 = smul.addr %s92, 64
          %s97 = scalar_lea.hbm %s0, %s96
          %s99 = sshll.u32 %s91, 4
          %s100 = int_to_ptr.vmem [resolvable:$true] %s99
          %102 = dma.hbm_to_vmem [thread:$0]  %s97, 256, %s100, %s88
        $region20: #{tpu_custom_call.1} parent=15 // pred_fallthru
          _
      $region16: #{tpu_custom_call.1} parent=5 // pred_fallthru
        _
      %p103 = scmp.le.s32.totalorder 1, %s13
      %p104 = scmp.lt.s32.totalorder %s13, 5
      %p105 = pnand %p103, %p104
      %p106 = pneg %p105
      // Predicated region
      $region21: #{tpu_custom_call.1} parent=5 // pred_check
        _
      $region22: #{tpu_custom_call.1} parent=5 // pred_check_branch
        %108 = sbr.rel (%p105) target = $region24
      $region23: #{tpu_custom_call.1} parent=5 // pred_region
        %s109 = ssub.s32 %s13, 1
        %s110 = sand.u32 %s26, 1
        %s111 = scalar_lea.sflag [#allocation3], %s110
        %s112 = sand.u32 %s26, 1
        %s113 = smul.addr %s112, 16
        %s114 = scalar_lea.vmem [#allocation2], %s113
        // Predicated region
        $region25: #{tpu_custom_call.1} parent=23 // pred_check
          %p115 = pneg %p39
        $region26: #{tpu_custom_call.1} parent=23 // pred_check_branch
          %117 = sbr.rel (%p115) target = $region28
        $region27: #{tpu_custom_call.1} parent=23 // pred_region
          %118 = dma.done %s111, 256
        $region28: #{tpu_custom_call.1} parent=23 // pred_fallthru
          _
        %s119 = sand.u32 %s26, 1
        %s120 = scalar_lea.sflag [#allocation3], %s119
        %s121 = sand.u32 %s26, 1
        %s122 = smul.addr %s121, 16
        %s123 = scalar_lea.vmem [#allocation2], %s122
        %p124 = pneg %p39
        %p125 = pneg %p36
        %p126 = pneg %p65
        %p127 = pneg %p62
        %s128 = sand.u32 %s52, 1
        %s129 = scalar_lea.sflag [#allocation4], %s128
        %s130 = sand.u32 %s52, 1
        %s131 = smul.addr %s130, 160
        %s132 = scalar_lea.vmem [#allocation5], %s131
        %s133 = smul.u32 4, %s18
        %s134 = smul.u32 4, %s18
        %v135 = vld [vmem:[%s114] sm:$0x77]
        %v136 = vld [vmem:[%s114 + $0x8] sm:$0x77]
        %v139 = vcombine.high %v135, %v135
        %v140 = vcombine.high %v136, %v136
        %143 = vst [vmem:[%s132] sm:$0x7] %v135
        %144 = vst [vmem:[%s132 + $0x8] sm:$0x7] %v139
        %145 = vst [vmem:[%s132 + $0x10] sm:$0x7] %v136
        %146 = vst [vmem:[%s132 + $0x18] sm:$0x7] %v140
        %v147 = vand.u32 2147483647, %v135
        %vm148 = vcmp.le.f32.partialorder %v147, 0.7853982
        %vm149 = vcmp.lt.s32.totalorder %v135, 0
        %v150 = vand.u32 %v135, 2139095040
        %v151 = vshrl.u32 %v150, 23
        %v152 = vsub.s32 %v151, 127
        %v153 = vand.u32 2147483647, %v135
        %v154 = vand.u32 %v153, 8388607
        %v155 = vor.u32 %v154, 8388608
        %v156 = vsub.s32 0, %v155
        %v157 = vadd.s32 %v152, 1
        %vm158 = vcmp.gt.s32.totalorder %v157, 0
        %v159 = vsel %vm158, %v157, 0
        %v160 = vshrl.u32 %v159, 5
        %v161 = vand.u32 %v159, 31
        %v162 = vsub.s32 32, %v161
        %v163 = vshrl.u32 683565275, %v162
        %v164 = vshll.u32 683565275, %v161
        %v165 = vshrl.u32 2475754826, %v162
        %v166 = vor.u32 %v164, %v165
        %v167 = vshll.u32 2475754826, %v161
        %v168 = vshrl.u32 2131351028, %v162
        %v169 = vor.u32 %v167, %v168
        %v170 = vshll.u32 2131351028, %v161
        %v171 = vshrl.u32 2102212464, %v162
        %v172 = vor.u32 %v170, %v171
        %v173 = vshll.u32 2102212464, %v161
        %v174 = vshrl.u32 920167782, %v162
        %v175 = vor.u32 %v173, %v174
        %v176 = vshll.u32 920167782, %v161
        %v177 = vshrl.u32 1326507024, %v162
        %v178 = vor.u32 %v176, %v177
        %vm179 = vcmp.lt.s32.totalorder %v160, 1
        %vm180 = vcmp.lt.s32.totalorder %v160, 2
        %vm181 = vcmp.lt.s32.totalorder %v160, 3
        %vm182 = vcmp.lt.s32.totalorder %v160, 4
        %v183 = vsel %vm179, %v163, %v166
        %v184 = vsel %vm182, %v172, 2102212464
        %v185 = vsel %vm181, %v169, %v184
        %v186 = vsel %vm180, %v183, %v185
        %v187 = vsel %vm179, %v166, %v169
        %v188 = vsel %vm182, %v175, 920167782
        %v189 = vsel %vm181, %v172, %v188
        %v190 = vsel %vm180, %v187, %v189
        %v191 = vsel %vm179, %v169, %v172
        %v192 = vsel %vm182, %v178, 1326507024
        %v193 = vsel %vm181, %v175, %v192
        %v194 = vsel %vm180, %v191, %v193
        %v195 = vshll.u32 %v155, 8
        %v196 = vmul.u32.u64.compose %v195, %v194
        %v197 = vextract.low.u32 %v196
        %v198 = vextract.high.u32 %v196
        %v199 = vmul.u32.u64.compose %v195, %v190
        %v200 = vextract.low.u32 %v199
        %v201 = vextract.high.u32 %v199
        %v202 = vmul.u32 %v195, %v186
        %v203 = vadd.s32 %v198, %v200
        %vm204 = vc.u32 %v198, %v200
        %v205 = vadd.s32 %v201, 1
        %v206 = vsel %vm204, %v205, %v201
        %v207 = vadd.s32 %v202, %v206
        %v208 = vadd.s32 %v207, 536870912
        %v209 = vshrl.u32 %v208, 30
        %v210 = vshll.u32 %v209, 30
        %v211 = vsub.s32 %v207, %v210
        %vm212 = vcmp.lt.s32.totalorder %v211, 0
        %v213 = vsub.s32 0, %v211
        %v214 = vsel %vm212, %v213, %v211
        %v215 = vclz %v214
        %v216 = vsub.s32 %v215, 2
        %vm217 = vcmp.gt.s32.totalorder 0, %v216
        %v218 = vsel %vm217, 0, %v216
        %v219 = vsub.s32 32, %v218
        %v220 = vshll.u32 %v211, %v218
        %v221 = vshrl.u32 %v203, %v219
        %v222 = vor.u32 %v220, %v221
        %v223 = vsub.s32 4294967266, %v218
        %v224 = vadd.s32 %v223, 127
        %v225 = vshll.u32 %v224, 23
        %v226 = vor.u32 4788187, %v225
        %v227 = vand.u32 2147483647, %v226
        %v229 = vcvt.s32.f32 %v222
        %v230 = vmul.f32 %v229, %v227
        %v231 = vxor.u32 %v230, 2147483648
        %v232 = vsel %vm149, %v231, %v230
        %v233 = vsub.s32 4, %v209
        %v234 = vsel %vm149, %v233, %v209
        %v235 = vsel %vm148, %v135, %v232
        %v236 = vsel %vm148, 0, %v234
        %v237 = vcosq.f32.pop %v235
        %v238 = vsinq.f32.pop %v235
        %vm239 = vweird.f32 %v135
        %v240 = vadd.s32 %v236, 3
        %v241 = vand.u32 %v240, 3
        %vm242 = vcmp.lt.s32.totalorder %v241, 2
        %vm243 = vcmp.eq.s32.totalorder %v241, 0
        %v244 = vxor.u32 %v238, 2147483648
        %v245 = vsel %vm243, %v237, %v244
        %vm246 = vcmp.eq.s32.totalorder %v241, 2
        %v247 = vxor.u32 %v237, 2147483648
        %v248 = vsel %vm246, %v247, %v238
        %v249 = vsel %vm242, %v245, %v248
        %v250 = vsel %vm239, nan, %v249
        %v251 = vand.u32 2147483647, %v136
        %vm252 = vcmp.le.f32.partialorder %v251, 0.7853982
        %vm253 = vcmp.lt.s32.totalorder %v136, 0
        %v254 = vand.u32 %v136, 2139095040
        %v255 = vshrl.u32 %v254, 23
        %v256 = vsub.s32 %v255, 127
        %v257 = vand.u32 2147483647, %v136
        %v258 = vand.u32 %v257, 8388607
        %v259 = vor.u32 %v258, 8388608
        %v260 = vsub.s32 0, %v259
        %v261 = vadd.s32 %v256, 1
        %vm262 = vcmp.gt.s32.totalorder %v261, 0
        %v263 = vsel %vm262, %v261, 0
        %v264 = vshrl.u32 %v263, 5
        %v265 = vand.u32 %v263, 31
        %v266 = vsub.s32 32, %v265
        %v267 = vshrl.u32 683565275, %v266
        %v268 = vshll.u32 683565275, %v265
        %v269 = vshrl.u32 2475754826, %v266
        %v270 = vor.u32 %v268, %v269
        %v271 = vshll.u32 2475754826, %v265
        %v272 = vshrl.u32 2131351028, %v266
        %v273 = vor.u32 %v271, %v272
        %v274 = vshll.u32 2131351028, %v265
        %v275 = vshrl.u32 2102212464, %v266
        %v276 = vor.u32 %v274, %v275
        %v277 = vshll.u32 2102212464, %v265
        %v278 = vshrl.u32 920167782, %v266
        %v279 = vor.u32 %v277, %v278
        %v280 = vshll.u32 920167782, %v265
        %v281 = vshrl.u32 1326507024, %v266
        %v282 = vor.u32 %v280, %v281
        %vm283 = vcmp.lt.s32.totalorder %v264, 1
        %vm284 = vcmp.lt.s32.totalorder %v264, 2
        %vm285 = vcmp.lt.s32.totalorder %v264, 3
        %vm286 = vcmp.lt.s32.totalorder %v264, 4
        %v287 = vsel %vm283, %v267, %v270
        %v288 = vsel %vm286, %v276, 2102212464
        %v289 = vsel %vm285, %v273, %v288
        %v290 = vsel %vm284, %v287, %v289
        %v291 = vsel %vm283, %v270, %v273
        %v292 = vsel %vm286, %v279, 920167782
        %v293 = vsel %vm285, %v276, %v292
        %v294 = vsel %vm284, %v291, %v293
        %v295 = vsel %vm283, %v273, %v276
        %v296 = vsel %vm286, %v282, 1326507024
        %v297 = vsel %vm285, %v279, %v296
        %v298 = vsel %vm284, %v295, %v297
        %v299 = vshll.u32 %v259, 8
        %v300 = vmul.u32.u64.compose %v299, %v298
        %v301 = vextract.low.u32 %v300
        %v302 = vextract.high.u32 %v300
        %v303 = vmul.u32.u64.compose %v299, %v294
        %v304 = vextract.low.u32 %v303
        %v305 = vextract.high.u32 %v303
        %v306 = vmul.u32 %v299, %v290
        %v307 = vadd.s32 %v302, %v304
        %vm308 = vc.u32 %v302, %v304
        %v309 = vadd.s32 %v305, 1
        %v310 = vsel %vm308, %v309, %v305
        %v311 = vadd.s32 %v306, %v310
        %v312 = vadd.s32 %v311, 536870912
        %v313 = vshrl.u32 %v312, 30
        %v314 = vshll.u32 %v313, 30
        %v315 = vsub.s32 %v311, %v314
        %vm316 = vcmp.lt.s32.totalorder %v315, 0
        %v317 = vsub.s32 0, %v315
        %v318 = vsel %vm316, %v317, %v315
        %v319 = vclz %v318
        %v320 = vsub.s32 %v319, 2
        %vm321 = vcmp.gt.s32.totalorder 0, %v320
        %v322 = vsel %vm321, 0, %v320
        %v323 = vsub.s32 32, %v322
        %v324 = vshll.u32 %v315, %v322
        %v325 = vshrl.u32 %v307, %v323
        %v326 = vor.u32 %v324, %v325
        %v327 = vsub.s32 4294967266, %v322
        %v328 = vadd.s32 %v327, 127
        %v329 = vshll.u32 %v328, 23
        %v330 = vor.u32 4788187, %v329
        %v331 = vand.u32 2147483647, %v330
        %v333 = vcvt.s32.f32 %v326
        %v334 = vmul.f32 %v333, %v331
        %v335 = vxor.u32 %v334, 2147483648
        %v336 = vsel %vm253, %v335, %v334
        %v337 = vsub.s32 4, %v313
        %v338 = vsel %vm253, %v337, %v313
        %v339 = vsel %vm252, %v136, %v336
        %v340 = vsel %vm252, 0, %v338
        %v341 = vcosq.f32.pop %v339
        %v342 = vsinq.f32.pop %v339
        %vm343 = vweird.f32 %v136
        %v344 = vadd.s32 %v340, 3
        %v345 = vand.u32 %v344, 3
        %vm346 = vcmp.lt.s32.totalorder %v345, 2
        %vm347 = vcmp.eq.s32.totalorder %v345, 0
        %v348 = vxor.u32 %v342, 2147483648
        %v349 = vsel %vm347, %v341, %v348
        %vm350 = vcmp.eq.s32.totalorder %v345, 2
        %v351 = vxor.u32 %v341, 2147483648
        %v352 = vsel %vm350, %v351, %v342
        %v353 = vsel %vm346, %v349, %v352
        %v354 = vsel %vm343, nan, %v353
        %v357 = vcombine.high %v250, %v250
        %v358 = vcombine.high %v354, %v354
        %v359 = vrot.slane %v250, 5
        %v360 = vrot.slane %v357, 5
        %v361 = vrot.slane %v354, 5
        %v362 = vrot.slane %v358, 5
        %367 = vst [vmem:[%s132] sm:$0x38] %v359
        %368 = vst [vmem:[%s132 + $0x8] sm:$0x38] %v360
        %369 = vst [vmem:[%s132 + $0x10] sm:$0x38] %v361
        %370 = vst [vmem:[%s132 + $0x18] sm:$0x38] %v362
        %v371 = vand.u32 2147483647, %v135
        %vm372 = vcmp.le.f32.partialorder %v371, 0.7853982
        %vm373 = vcmp.lt.s32.totalorder %v135, 0
        %v374 = vand.u32 %v135, 2139095040
        %v375 = vshrl.u32 %v374, 23
        %v376 = vsub.s32 %v375, 127
        %v377 = vand.u32 2147483647, %v135
        %v378 = vand.u32 %v377, 8388607
        %v379 = vor.u32 %v378, 8388608
        %v380 = vsub.s32 0, %v379
        %v381 = vadd.s32 %v376, 1
        %vm382 = vcmp.gt.s32.totalorder %v381, 0
        %v383 = vsel %vm382, %v381, 0
        %v384 = vshrl.u32 %v383, 5
        %v385 = vand.u32 %v383, 31
        %v386 = vsub.s32 32, %v385
        %v387 = vshrl.u32 683565275, %v386
        %v388 = vshll.u32 683565275, %v385
        %v389 = vshrl.u32 2475754826, %v386
        %v390 = vor.u32 %v388, %v389
        %v391 = vshll.u32 2475754826, %v385
        %v392 = vshrl.u32 2131351028, %v386
        %v393 = vor.u32 %v391, %v392
        %v394 = vshll.u32 2131351028, %v385
        %v395 = vshrl.u32 2102212464, %v386
        %v396 = vor.u32 %v394, %v395
        %v397 = vshll.u32 2102212464, %v385
        %v398 = vshrl.u32 920167782, %v386
        %v399 = vor.u32 %v397, %v398
        %v400 = vshll.u32 920167782, %v385
        %v401 = vshrl.u32 1326507024, %v386
        %v402 = vor.u32 %v400, %v401
        %vm403 = vcmp.lt.s32.totalorder %v384, 1
        %vm404 = vcmp.lt.s32.totalorder %v384, 2
        %vm405 = vcmp.lt.s32.totalorder %v384, 3
        %vm406 = vcmp.lt.s32.totalorder %v384, 4
        %v407 = vsel %vm403, %v387, %v390
        %v408 = vsel %vm406, %v396, 2102212464
        %v409 = vsel %vm405, %v393, %v408
        %v410 = vsel %vm404, %v407, %v409
        %v411 = vsel %vm403, %v390, %v393
        %v412 = vsel %vm406, %v399, 920167782
        %v413 = vsel %vm405, %v396, %v412
        %v414 = vsel %vm404, %v411, %v413
        %v415 = vsel %vm403, %v393, %v396
        %v416 = vsel %vm406, %v402, 1326507024
        %v417 = vsel %vm405, %v399, %v416
        %v418 = vsel %vm404, %v415, %v417
        %v419 = vshll.u32 %v379, 8
        %v420 = vmul.u32.u64.compose %v419, %v418
        %v421 = vextract.low.u32 %v420
        %v422 = vextract.high.u32 %v420
        %v423 = vmul.u32.u64.compose %v419, %v414
        %v424 = vextract.low.u32 %v423
        %v425 = vextract.high.u32 %v423
        %v426 = vmul.u32 %v419, %v410
        %v427 = vadd.s32 %v422, %v424
        %vm428 = vc.u32 %v422, %v424
        %v429 = vadd.s32 %v425, 1
        %v430 = vsel %vm428, %v429, %v425
        %v431 = vadd.s32 %v426, %v430
        %v432 = vadd.s32 %v431, 536870912
        %v433 = vshrl.u32 %v432, 30
        %v434 = vshll.u32 %v433, 30
        %v435 = vsub.s32 %v431, %v434
        %vm436 = vcmp.lt.s32.totalorder %v435, 0
        %v437 = vsub.s32 0, %v435
        %v438 = vsel %vm436, %v437, %v435
        %v439 = vclz %v438
        %v440 = vsub.s32 %v439, 2
        %vm441 = vcmp.gt.s32.totalorder 0, %v440
        %v442 = vsel %vm441, 0, %v440
        %v443 = vsub.s32 32, %v442
        %v444 = vshll.u32 %v435, %v442
        %v445 = vshrl.u32 %v427, %v443
        %v446 = vor.u32 %v444, %v445
        %v447 = vsub.s32 4294967266, %v442
        %v448 = vadd.s32 %v447, 127
        %v449 = vshll.u32 %v448, 23
        %v450 = vor.u32 4788187, %v449
        %v451 = vand.u32 2147483647, %v450
        %v453 = vcvt.s32.f32 %v446
        %v454 = vmul.f32 %v453, %v451
        %v455 = vxor.u32 %v454, 2147483648
        %v456 = vsel %vm373, %v455, %v454
        %v457 = vsub.s32 4, %v433
        %v458 = vsel %vm373, %v457, %v433
        %v459 = vsel %vm372, %v135, %v456
        %v460 = vsel %vm372, 0, %v458
        %v461 = vcosq.f32.pop %v459
        %v462 = vsinq.f32.pop %v459
        %vm463 = vweird.f32 %v135
        %v464 = vand.u32 %v460, 3
        %vm465 = vcmp.lt.s32.totalorder %v464, 2
        %vm466 = vcmp.eq.s32.totalorder %v464, 0
        %v467 = vxor.u32 %v462, 2147483648
        %v468 = vsel %vm466, %v461, %v467
        %vm469 = vcmp.eq.s32.totalorder %v464, 2
        %v470 = vxor.u32 %v461, 2147483648
        %v471 = vsel %vm469, %v470, %v462
        %v472 = vsel %vm465, %v468, %v471
        %v473 = vsel %vm463, nan, %v472
        %v474 = vand.u32 2147483647, %v136
        %vm475 = vcmp.le.f32.partialorder %v474, 0.7853982
        %vm476 = vcmp.lt.s32.totalorder %v136, 0
        %v477 = vand.u32 %v136, 2139095040
        %v478 = vshrl.u32 %v477, 23
        %v479 = vsub.s32 %v478, 127
        %v480 = vand.u32 2147483647, %v136
        %v481 = vand.u32 %v480, 8388607
        %v482 = vor.u32 %v481, 8388608
        %v483 = vsub.s32 0, %v482
        %v484 = vadd.s32 %v479, 1
        %vm485 = vcmp.gt.s32.totalorder %v484, 0
        %v486 = vsel %vm485, %v484, 0
        %v487 = vshrl.u32 %v486, 5
        %v488 = vand.u32 %v486, 31
        %v489 = vsub.s32 32, %v488
        %v490 = vshrl.u32 683565275, %v489
        %v491 = vshll.u32 683565275, %v488
        %v492 = vshrl.u32 2475754826, %v489
        %v493 = vor.u32 %v491, %v492
        %v494 = vshll.u32 2475754826, %v488
        %v495 = vshrl.u32 2131351028, %v489
        %v496 = vor.u32 %v494, %v495
        %v497 = vshll.u32 2131351028, %v488
        %v498 = vshrl.u32 2102212464, %v489
        %v499 = vor.u32 %v497, %v498
        %v500 = vshll.u32 2102212464, %v488
        %v501 = vshrl.u32 920167782, %v489
        %v502 = vor.u32 %v500, %v501
        %v503 = vshll.u32 920167782, %v488
        %v504 = vshrl.u32 1326507024, %v489
        %v505 = vor.u32 %v503, %v504
        %vm506 = vcmp.lt.s32.totalorder %v487, 1
        %vm507 = vcmp.lt.s32.totalorder %v487, 2
        %vm508 = vcmp.lt.s32.totalorder %v487, 3
        %vm509 = vcmp.lt.s32.totalorder %v487, 4
        %v510 = vsel %vm506, %v490, %v493
        %v511 = vsel %vm509, %v499, 2102212464
        %v512 = vsel %vm508, %v496, %v511
        %v513 = vsel %vm507, %v510, %v512
        %v514 = vsel %vm506, %v493, %v496
        %v515 = vsel %vm509, %v502, 920167782
        %v516 = vsel %vm508, %v499, %v515
        %v517 = vsel %vm507, %v514, %v516
        %v518 = vsel %vm506, %v496, %v499
        %v519 = vsel %vm509, %v505, 1326507024
        %v520 = vsel %vm508, %v502, %v519
        %v521 = vsel %vm507, %v518, %v520
        %v522 = vshll.u32 %v482, 8
        %v523 = vmul.u32.u64.compose %v522, %v521
        %v524 = vextract.low.u32 %v523
        %v525 = vextract.high.u32 %v523
        %v526 = vmul.u32.u64.compose %v522, %v517
        %v527 = vextract.low.u32 %v526
        %v528 = vextract.high.u32 %v526
        %v529 = vmul.u32 %v522, %v513
        %v530 = vadd.s32 %v525, %v527
        %vm531 = vc.u32 %v525, %v527
        %v532 = vadd.s32 %v528, 1
        %v533 = vsel %vm531, %v532, %v528
        %v534 = vadd.s32 %v529, %v533
        %v535 = vadd.s32 %v534, 536870912
        %v536 = vshrl.u32 %v535, 30
        %v537 = vshll.u32 %v536, 30
        %v538 = vsub.s32 %v534, %v537
        %vm539 = vcmp.lt.s32.totalorder %v538, 0
        %v540 = vsub.s32 0, %v538
        %v541 = vsel %vm539, %v540, %v538
        %v542 = vclz %v541
        %v543 = vsub.s32 %v542, 2
        %vm544 = vcmp.gt.s32.totalorder 0, %v543
        %v545 = vsel %vm544, 0, %v543
        %v546 = vsub.s32 32, %v545
        %v547 = vshll.u32 %v538, %v545
        %v548 = vshrl.u32 %v530, %v546
        %v549 = vor.u32 %v547, %v548
        %v550 = vsub.s32 4294967266, %v545
        %v551 = vadd.s32 %v550, 127
        %v552 = vshll.u32 %v551, 23
        %v553 = vor.u32 4788187, %v552
        %v554 = vand.u32 2147483647, %v553
        %v556 = vcvt.s32.f32 %v549
        %v557 = vmul.f32 %v556, %v554
        %v558 = vxor.u32 %v557, 2147483648
        %v559 = vsel %vm476, %v558, %v557
        %v560 = vsub.s32 4, %v536
        %v561 = vsel %vm476, %v560, %v536
        %v562 = vsel %vm475, %v136, %v559
        %v563 = vsel %vm475, 0, %v561
        %v564 = vcosq.f32.pop %v562
        %v565 = vsinq.f32.pop %v562
        %vm566 = vweird.f32 %v136
        %v567 = vand.u32 %v563, 3
        %vm568 = vcmp.lt.s32.totalorder %v567, 2
        %vm569 = vcmp.eq.s32.totalorder %v567, 0
        %v570 = vxor.u32 %v565, 2147483648
        %v571 = vsel %vm569, %v564, %v570
        %vm572 = vcmp.eq.s32.totalorder %v567, 2
        %v573 = vxor.u32 %v564, 2147483648
        %v574 = vsel %vm572, %v573, %v565
        %v575 = vsel %vm568, %v571, %v574
        %v576 = vsel %vm566, nan, %v575
        %v579 = vcombine.high %v473, %v473
        %v580 = vcombine.high %v576, %v576
        %v581 = vrot.slane %v473, 2
        %v582 = vrot.slane %v579, 2
        %v583 = vrot.slane %v576, 2
        %v584 = vrot.slane %v580, 2
        %589 = vst [vmem:[%s132] sm:$0xc0] %v581
        %590 = vst [vmem:[%s132 + $0x8] sm:$0xc0] %v582
        %591 = vst [vmem:[%s132 + $0x10] sm:$0xc0] %v583
        %592 = vst [vmem:[%s132 + $0x18] sm:$0xc0] %v584
        %593 = vst [vmem:[%s132 + $0x20] sm:$0x1] %v581
        %594 = vst [vmem:[%s132 + $0x28] sm:$0x1] %v582
        %595 = vst [vmem:[%s132 + $0x30] sm:$0x1] %v583
        %596 = vst [vmem:[%s132 + $0x38] sm:$0x1] %v584
        %v597 = vmul.f32 %v135, 2.0
        %v598 = vmul.f32 %v136, 2.0
        %v599 = vand.u32 2147483647, %v597
        %vm600 = vcmp.le.f32.partialorder %v599, 0.7853982
        %vm601 = vcmp.lt.s32.totalorder %v597, 0
        %v602 = vand.u32 %v597, 2139095040
        %v603 = vshrl.u32 %v602, 23
        %v604 = vsub.s32 %v603, 127
        %v605 = vand.u32 2147483647, %v597
        %v606 = vand.u32 %v605, 8388607
        %v607 = vor.u32 %v606, 8388608
        %v608 = vsub.s32 0, %v607
        %v609 = vadd.s32 %v604, 1
        %vm610 = vcmp.gt.s32.totalorder %v609, 0
        %v611 = vsel %vm610, %v609, 0
        %v612 = vshrl.u32 %v611, 5
        %v613 = vand.u32 %v611, 31
        %v614 = vsub.s32 32, %v613
        %v615 = vshrl.u32 683565275, %v614
        %v616 = vshll.u32 683565275, %v613
        %v617 = vshrl.u32 2475754826, %v614
        %v618 = vor.u32 %v616, %v617
        %v619 = vshll.u32 2475754826, %v613
        %v620 = vshrl.u32 2131351028, %v614
        %v621 = vor.u32 %v619, %v620
        %v622 = vshll.u32 2131351028, %v613
        %v623 = vshrl.u32 2102212464, %v614
        %v624 = vor.u32 %v622, %v623
        %v625 = vshll.u32 2102212464, %v613
        %v626 = vshrl.u32 920167782, %v614
        %v627 = vor.u32 %v625, %v626
        %v628 = vshll.u32 920167782, %v613
        %v629 = vshrl.u32 1326507024, %v614
        %v630 = vor.u32 %v628, %v629
        %vm631 = vcmp.lt.s32.totalorder %v612, 1
        %vm632 = vcmp.lt.s32.totalorder %v612, 2
        %vm633 = vcmp.lt.s32.totalorder %v612, 3
        %vm634 = vcmp.lt.s32.totalorder %v612, 4
        %v635 = vsel %vm631, %v615, %v618
        %v636 = vsel %vm634, %v624, 2102212464
        %v637 = vsel %vm633, %v621, %v636
        %v638 = vsel %vm632, %v635, %v637
        %v639 = vsel %vm631, %v618, %v621
        %v640 = vsel %vm634, %v627, 920167782
        %v641 = vsel %vm633, %v624, %v640
        %v642 = vsel %vm632, %v639, %v641
        %v643 = vsel %vm631, %v621, %v624
        %v644 = vsel %vm634, %v630, 1326507024
        %v645 = vsel %vm633, %v627, %v644
        %v646 = vsel %vm632, %v643, %v645
        %v647 = vshll.u32 %v607, 8
        %v648 = vmul.u32.u64.compose %v647, %v646
        %v649 = vextract.low.u32 %v648
        %v650 = vextract.high.u32 %v648
        %v651 = vmul.u32.u64.compose %v647, %v642
        %v652 = vextract.low.u32 %v651
        %v653 = vextract.high.u32 %v651
        %v654 = vmul.u32 %v647, %v638
        %v655 = vadd.s32 %v650, %v652
        %vm656 = vc.u32 %v650, %v652
        %v657 = vadd.s32 %v653, 1
        %v658 = vsel %vm656, %v657, %v653
        %v659 = vadd.s32 %v654, %v658
        %v660 = vadd.s32 %v659, 536870912
        %v661 = vshrl.u32 %v660, 30
        %v662 = vshll.u32 %v661, 30
        %v663 = vsub.s32 %v659, %v662
        %vm664 = vcmp.lt.s32.totalorder %v663, 0
        %v665 = vsub.s32 0, %v663
        %v666 = vsel %vm664, %v665, %v663
        %v667 = vclz %v666
        %v668 = vsub.s32 %v667, 2
        %vm669 = vcmp.gt.s32.totalorder 0, %v668
        %v670 = vsel %vm669, 0, %v668
        %v671 = vsub.s32 32, %v670
        %v672 = vshll.u32 %v663, %v670
        %v673 = vshrl.u32 %v655, %v671
        %v674 = vor.u32 %v672, %v673
        %v675 = vsub.s32 4294967266, %v670
        %v676 = vadd.s32 %v675, 127
        %v677 = vshll.u32 %v676, 23
        %v678 = vor.u32 4788187, %v677
        %v679 = vand.u32 2147483647, %v678
        %v681 = vcvt.s32.f32 %v674
        %v682 = vmul.f32 %v681, %v679
        %v683 = vxor.u32 %v682, 2147483648
        %v684 = vsel %vm601, %v683, %v682
        %v685 = vsub.s32 4, %v661
        %v686 = vsel %vm601, %v685, %v661
        %v687 = vsel %vm600, %v597, %v684
        %v688 = vsel %vm600, 0, %v686
        %v689 = vcosq.f32.pop %v687
        %v690 = vsinq.f32.pop %v687
        %vm691 = vweird.f32 %v597
        %v692 = vadd.s32 %v688, 3
        %v693 = vand.u32 %v692, 3
        %vm694 = vcmp.lt.s32.totalorder %v693, 2
        %vm695 = vcmp.eq.s32.totalorder %v693, 0
        %v696 = vxor.u32 %v690, 2147483648
        %v697 = vsel %vm695, %v689, %v696
        %vm698 = vcmp.eq.s32.totalorder %v693, 2
        %v699 = vxor.u32 %v689, 2147483648
        %v700 = vsel %vm698, %v699, %v690
        %v701 = vsel %vm694, %v697, %v700
        %v702 = vsel %vm691, nan, %v701
        %v703 = vand.u32 2147483647, %v598
        %vm704 = vcmp.le.f32.partialorder %v703, 0.7853982
        %vm705 = vcmp.lt.s32.totalorder %v598, 0
        %v706 = vand.u32 %v598, 2139095040
        %v707 = vshrl.u32 %v706, 23
        %v708 = vsub.s32 %v707, 127
        %v709 = vand.u32 2147483647, %v598
        %v710 = vand.u32 %v709, 8388607
        %v711 = vor.u32 %v710, 8388608
        %v712 = vsub.s32 0, %v711
        %v713 = vadd.s32 %v708, 1
        %vm714 = vcmp.gt.s32.totalorder %v713, 0
        %v715 = vsel %vm714, %v713, 0
        %v716 = vshrl.u32 %v715, 5
        %v717 = vand.u32 %v715, 31
        %v718 = vsub.s32 32, %v717
        %v719 = vshrl.u32 683565275, %v718
        %v720 = vshll.u32 683565275, %v717
        %v721 = vshrl.u32 2475754826, %v718
        %v722 = vor.u32 %v720, %v721
        %v723 = vshll.u32 2475754826, %v717
        %v724 = vshrl.u32 2131351028, %v718
        %v725 = vor.u32 %v723, %v724
        %v726 = vshll.u32 2131351028, %v717
        %v727 = vshrl.u32 2102212464, %v718
        %v728 = vor.u32 %v726, %v727
        %v729 = vshll.u32 2102212464, %v717
        %v730 = vshrl.u32 920167782, %v718
        %v731 = vor.u32 %v729, %v730
        %v732 = vshll.u32 920167782, %v717
        %v733 = vshrl.u32 1326507024, %v718
        %v734 = vor.u32 %v732, %v733
        %vm735 = vcmp.lt.s32.totalorder %v716, 1
        %vm736 = vcmp.lt.s32.totalorder %v716, 2
        %vm737 = vcmp.lt.s32.totalorder %v716, 3
        %vm738 = vcmp.lt.s32.totalorder %v716, 4
        %v739 = vsel %vm735, %v719, %v722
        %v740 = vsel %vm738, %v728, 2102212464
        %v741 = vsel %vm737, %v725, %v740
        %v742 = vsel %vm736, %v739, %v741
        %v743 = vsel %vm735, %v722, %v725
        %v744 = vsel %vm738, %v731, 920167782
        %v745 = vsel %vm737, %v728, %v744
        %v746 = vsel %vm736, %v743, %v745
        %v747 = vsel %vm735, %v725, %v728
        %v748 = vsel %vm738, %v734, 1326507024
        %v749 = vsel %vm737, %v731, %v748
        %v750 = vsel %vm736, %v747, %v749
        %v751 = vshll.u32 %v711, 8
        %v752 = vmul.u32.u64.compose %v751, %v750
        %v753 = vextract.low.u32 %v752
        %v754 = vextract.high.u32 %v752
        %v755 = vmul.u32.u64.compose %v751, %v746
        %v756 = vextract.low.u32 %v755
        %v757 = vextract.high.u32 %v755
        %v758 = vmul.u32 %v751, %v742
        %v759 = vadd.s32 %v754, %v756
        %vm760 = vc.u32 %v754, %v756
        %v761 = vadd.s32 %v757, 1
        %v762 = vsel %vm760, %v761, %v757
        %v763 = vadd.s32 %v758, %v762
        %v764 = vadd.s32 %v763, 536870912
        %v765 = vshrl.u32 %v764, 30
        %v766 = vshll.u32 %v765, 30
        %v767 = vsub.s32 %v763, %v766
        %vm768 = vcmp.lt.s32.totalorder %v767, 0
        %v769 = vsub.s32 0, %v767
        %v770 = vsel %vm768, %v769, %v767
        %v771 = vclz %v770
        %v772 = vsub.s32 %v771, 2
        %vm773 = vcmp.gt.s32.totalorder 0, %v772
        %v774 = vsel %vm773, 0, %v772
        %v775 = vsub.s32 32, %v774
        %v776 = vshll.u32 %v767, %v774
        %v777 = vshrl.u32 %v759, %v775
        %v778 = vor.u32 %v776, %v777
        %v779 = vsub.s32 4294967266, %v774
        %v780 = vadd.s32 %v779, 127
        %v781 = vshll.u32 %v780, 23
        %v782 = vor.u32 4788187, %v781
        %v783 = vand.u32 2147483647, %v782
        %v785 = vcvt.s32.f32 %v778
        %v786 = vmul.f32 %v785, %v783
        %v787 = vxor.u32 %v786, 2147483648
        %v788 = vsel %vm705, %v787, %v786
        %v789 = vsub.s32 4, %v765
        %v790 = vsel %vm705, %v789, %v765
        %v791 = vsel %vm704, %v598, %v788
        %v792 = vsel %vm704, 0, %v790
        %v793 = vcosq.f32.pop %v791
        %v794 = vsinq.f32.pop %v791
        %vm795 = vweird.f32 %v598
        %v796 = vadd.s32 %v792, 3
        %v797 = vand.u32 %v796, 3
        %vm798 = vcmp.lt.s32.totalorder %v797, 2
        %vm799 = vcmp.eq.s32.totalorder %v797, 0
        %v800 = vxor.u32 %v794, 2147483648
        %v801 = vsel %vm799, %v793, %v800
        %vm802 = vcmp.eq.s32.totalorder %v797, 2
        %v803 = vxor.u32 %v793, 2147483648
        %v804 = vsel %vm802, %v803, %v794
        %v805 = vsel %vm798, %v801, %v804
        %v806 = vsel %vm795, nan, %v805
        %v809 = vcombine.high %v702, %v702
        %v810 = vcombine.high %v806, %v806
        %v811 = vrot.slane %v702, 7
        %v812 = vrot.slane %v809, 7
        %v813 = vrot.slane %v806, 7
        %v814 = vrot.slane %v810, 7
        %819 = vst [vmem:[%s132 + $0x20] sm:$0xe] %v811
        %820 = vst [vmem:[%s132 + $0x28] sm:$0xe] %v812
        %821 = vst [vmem:[%s132 + $0x30] sm:$0xe] %v813
        %822 = vst [vmem:[%s132 + $0x38] sm:$0xe] %v814
        %v823 = vand.u32 2147483647, %v597
        %vm824 = vcmp.le.f32.partialorder %v823, 0.7853982
        %vm825 = vcmp.lt.s32.totalorder %v597, 0
        %v826 = vand.u32 %v597, 2139095040
        %v827 = vshrl.u32 %v826, 23
        %v828 = vsub.s32 %v827, 127
        %v829 = vand.u32 2147483647, %v597
        %v830 = vand.u32 %v829, 8388607
        %v831 = vor.u32 %v830, 8388608
        %v832 = vsub.s32 0, %v831
        %v833 = vadd.s32 %v828, 1
        %vm834 = vcmp.gt.s32.totalorder %v833, 0
        %v835 = vsel %vm834, %v833, 0
        %v836 = vshrl.u32 %v835, 5
        %v837 = vand.u32 %v835, 31
        %v838 = vsub.s32 32, %v837
        %v839 = vshrl.u32 683565275, %v838
        %v840 = vshll.u32 683565275, %v837
        %v841 = vshrl.u32 2475754826, %v838
        %v842 = vor.u32 %v840, %v841
        %v843 = vshll.u32 2475754826, %v837
        %v844 = vshrl.u32 2131351028, %v838
        %v845 = vor.u32 %v843, %v844
        %v846 = vshll.u32 2131351028, %v837
        %v847 = vshrl.u32 2102212464, %v838
        %v848 = vor.u32 %v846, %v847
        %v849 = vshll.u32 2102212464, %v837
        %v850 = vshrl.u32 920167782, %v838
        %v851 = vor.u32 %v849, %v850
        %v852 = vshll.u32 920167782, %v837
        %v853 = vshrl.u32 1326507024, %v838
        %v854 = vor.u32 %v852, %v853
        %vm855 = vcmp.lt.s32.totalorder %v836, 1
        %vm856 = vcmp.lt.s32.totalorder %v836, 2
        %vm857 = vcmp.lt.s32.totalorder %v836, 3
        %vm858 = vcmp.lt.s32.totalorder %v836, 4
        %v859 = vsel %vm855, %v839, %v842
        %v860 = vsel %vm858, %v848, 2102212464
        %v861 = vsel %vm857, %v845, %v860
        %v862 = vsel %vm856, %v859, %v861
        %v863 = vsel %vm855, %v842, %v845
        %v864 = vsel %vm858, %v851, 920167782
        %v865 = vsel %vm857, %v848, %v864
        %v866 = vsel %vm856, %v863, %v865
        %v867 = vsel %vm855, %v845, %v848
        %v868 = vsel %vm858, %v854, 1326507024
        %v869 = vsel %vm857, %v851, %v868
        %v870 = vsel %vm856, %v867, %v869
        %v871 = vshll.u32 %v831, 8
        %v872 = vmul.u32.u64.compose %v871, %v870
        %v873 = vextract.low.u32 %v872
        %v874 = vextract.high.u32 %v872
        %v875 = vmul.u32.u64.compose %v871, %v866
        %v876 = vextract.low.u32 %v875
        %v877 = vextract.high.u32 %v875
        %v878 = vmul.u32 %v871, %v862
        %v879 = vadd.s32 %v874, %v876
        %vm880 = vc.u32 %v874, %v876
        %v881 = vadd.s32 %v877, 1
        %v882 = vsel %vm880, %v881, %v877
        %v883 = vadd.s32 %v878, %v882
        %v884 = vadd.s32 %v883, 536870912
        %v885 = vshrl.u32 %v884, 30
        %v886 = vshll.u32 %v885, 30
        %v887 = vsub.s32 %v883, %v886
        %vm888 = vcmp.lt.s32.totalorder %v887, 0
        %v889 = vsub.s32 0, %v887
        %v890 = vsel %vm888, %v889, %v887
        %v891 = vclz %v890
        %v892 = vsub.s32 %v891, 2
        %vm893 = vcmp.gt.s32.totalorder 0, %v892
        %v894 = vsel %vm893, 0, %v892
        %v895 = vsub.s32 32, %v894
        %v896 = vshll.u32 %v887, %v894
        %v897 = vshrl.u32 %v879, %v895
        %v898 = vor.u32 %v896, %v897
        %v899 = vsub.s32 4294967266, %v894
        %v900 = vadd.s32 %v899, 127
        %v901 = vshll.u32 %v900, 23
        %v902 = vor.u32 4788187, %v901
        %v903 = vand.u32 2147483647, %v902
        %v905 = vcvt.s32.f32 %v898
        %v906 = vmul.f32 %v905, %v903
        %v907 = vxor.u32 %v906, 2147483648
        %v908 = vsel %vm825, %v907, %v906
        %v909 = vsub.s32 4, %v885
        %v910 = vsel %vm825, %v909, %v885
        %v911 = vsel %vm824, %v597, %v908
        %v912 = vsel %vm824, 0, %v910
        %v913 = vcosq.f32.pop %v911
        %v914 = vsinq.f32.pop %v911
        %vm915 = vweird.f32 %v597
        %v916 = vand.u32 %v912, 3
        %vm917 = vcmp.lt.s32.totalorder %v916, 2
        %vm918 = vcmp.eq.s32.totalorder %v916, 0
        %v919 = vxor.u32 %v914, 2147483648
        %v920 = vsel %vm918, %v913, %v919
        %vm921 = vcmp.eq.s32.totalorder %v916, 2
        %v922 = vxor.u32 %v913, 2147483648
        %v923 = vsel %vm921, %v922, %v914
        %v924 = vsel %vm917, %v920, %v923
        %v925 = vsel %vm915, nan, %v924
        %v926 = vand.u32 2147483647, %v598
        %vm927 = vcmp.le.f32.partialorder %v926, 0.7853982
        %vm928 = vcmp.lt.s32.totalorder %v598, 0
        %v929 = vand.u32 %v598, 2139095040
        %v930 = vshrl.u32 %v929, 23
        %v931 = vsub.s32 %v930, 127
        %v932 = vand.u32 2147483647, %v598
        %v933 = vand.u32 %v932, 8388607
        %v934 = vor.u32 %v933, 8388608
        %v935 = vsub.s32 0, %v934
        %v936 = vadd.s32 %v931, 1
        %vm937 = vcmp.gt.s32.totalorder %v936, 0
        %v938 = vsel %vm937, %v936, 0
        %v939 = vshrl.u32 %v938, 5
        %v940 = vand.u32 %v938, 31
        %v941 = vsub.s32 32, %v940
        %v942 = vshrl.u32 683565275, %v941
        %v943 = vshll.u32 683565275, %v940
        %v944 = vshrl.u32 2475754826, %v941
        %v945 = vor.u32 %v943, %v944
        %v946 = vshll.u32 2475754826, %v940
        %v947 = vshrl.u32 2131351028, %v941
        %v948 = vor.u32 %v946, %v947
        %v949 = vshll.u32 2131351028, %v940
        %v950 = vshrl.u32 2102212464, %v941
        %v951 = vor.u32 %v949, %v950
        %v952 = vshll.u32 2102212464, %v940
        %v953 = vshrl.u32 920167782, %v941
        %v954 = vor.u32 %v952, %v953
        %v955 = vshll.u32 920167782, %v940
        %v956 = vshrl.u32 1326507024, %v941
        %v957 = vor.u32 %v955, %v956
        %vm958 = vcmp.lt.s32.totalorder %v939, 1
        %vm959 = vcmp.lt.s32.totalorder %v939, 2
        %vm960 = vcmp.lt.s32.totalorder %v939, 3
        %vm961 = vcmp.lt.s32.totalorder %v939, 4
        %v962 = vsel %vm958, %v942, %v945
        %v963 = vsel %vm961, %v951, 2102212464
        %v964 = vsel %vm960, %v948, %v963
        %v965 = vsel %vm959, %v962, %v964
        %v966 = vsel %vm958, %v945, %v948
        %v967 = vsel %vm961, %v954, 920167782
        %v968 = vsel %vm960, %v951, %v967
        %v969 = vsel %vm959, %v966, %v968
        %v970 = vsel %vm958, %v948, %v951
        %v971 = vsel %vm961, %v957, 1326507024
        %v972 = vsel %vm960, %v954, %v971
        %v973 = vsel %vm959, %v970, %v972
        %v974 = vshll.u32 %v934, 8
        %v975 = vmul.u32.u64.compose %v974, %v973
        %v976 = vextract.low.u32 %v975
        %v977 = vextract.high.u32 %v975
        %v978 = vmul.u32.u64.compose %v974, %v969
        %v979 = vextract.low.u32 %v978
        %v980 = vextract.high.u32 %v978
        %v981 = vmul.u32 %v974, %v965
        %v982 = vadd.s32 %v977, %v979
        %vm983 = vc.u32 %v977, %v979
        %v984 = vadd.s32 %v980, 1
        %v985 = vsel %vm983, %v984, %v980
        %v986 = vadd.s32 %v981, %v985
        %v987 = vadd.s32 %v986, 536870912
        %v988 = vshrl.u32 %v987, 30
        %v989 = vshll.u32 %v988, 30
        %v990 = vsub.s32 %v986, %v989
        %vm991 = vcmp.lt.s32.totalorder %v990, 0
        %v992 = vsub.s32 0, %v990
        %v993 = vsel %vm991, %v992, %v990
        %v994 = vclz %v993
        %v995 = vsub.s32 %v994, 2
        %vm996 = vcmp.gt.s32.totalorder 0, %v995
        %v997 = vsel %vm996, 0, %v995
        %v998 = vsub.s32 32, %v997
        %v999 = vshll.u32 %v990, %v997
        %v1000 = vshrl.u32 %v982, %v998
        %v1001 = vor.u32 %v999, %v1000
        %v1002 = vsub.s32 4294967266, %v997
        %v1003 = vadd.s32 %v1002, 127
        %v1004 = vshll.u32 %v1003, 23
        %v1005 = vor.u32 4788187, %v1004
        %v1006 = vand.u32 2147483647, %v1005
        %v1008 = vcvt.s32.f32 %v1001
        %v1009 = vmul.f32 %v1008, %v1006
        %v1010 = vxor.u32 %v1009, 2147483648
        %v1011 = vsel %vm928, %v1010, %v1009
        %v1012 = vsub.s32 4, %v988
        %v1013 = vsel %vm928, %v1012, %v988
        %v1014 = vsel %vm927, %v598, %v1011
        %v1015 = vsel %vm927, 0, %v1013
        %v1016 = vcosq.f32.pop %v1014
        %v1017 = vsinq.f32.pop %v1014
        %vm1018 = vweird.f32 %v598
        %v1019 = vand.u32 %v1015, 3
        %vm1020 = vcmp.lt.s32.totalorder %v1019, 2
        %vm1021 = vcmp.eq.s32.totalorder %v1019, 0
        %v1022 = vxor.u32 %v1017, 2147483648
        %v1023 = vsel %vm1021, %v1016, %v1022
        %vm1024 = vcmp.eq.s32.totalorder %v1019, 2
        %v1025 = vxor.u32 %v1016, 2147483648
        %v1026 = vsel %vm1024, %v1025, %v1017
        %v1027 = vsel %vm1020, %v1023, %v1026
        %v1028 = vsel %vm1018, nan, %v1027
        %v1031 = vcombine.low %v925, %v925
        %v1032 = vcombine.low %v1028, %v1028
        %1035 = vst [vmem:[%s132 + $0x20] sm:$0x70] %v1031
        %1036 = vst [vmem:[%s132 + $0x28] sm:$0x70] %v925
        %1037 = vst [vmem:[%s132 + $0x30] sm:$0x70] %v1032
        %1038 = vst [vmem:[%s132 + $0x38] sm:$0x70] %v1028
        %v1039 = vmul.f32 %v135, 4.0
        %v1040 = vmul.f32 %v136, 4.0
        %v1041 = vand.u32 2147483647, %v1039
        %vm1042 = vcmp.le.f32.partialorder %v1041, 0.7853982
        %vm1043 = vcmp.lt.s32.totalorder %v1039, 0
        %v1044 = vand.u32 %v1039, 2139095040
        %v1045 = vshrl.u32 %v1044, 23
        %v1046 = vsub.s32 %v1045, 127
        %v1047 = vand.u32 2147483647, %v1039
        %v1048 = vand.u32 %v1047, 8388607
        %v1049 = vor.u32 %v1048, 8388608
        %v1050 = vsub.s32 0, %v1049
        %v1051 = vadd.s32 %v1046, 1
        %vm1052 = vcmp.gt.s32.totalorder %v1051, 0
        %v1053 = vsel %vm1052, %v1051, 0
        %v1054 = vshrl.u32 %v1053, 5
        %v1055 = vand.u32 %v1053, 31
        %v1056 = vsub.s32 32, %v1055
        %v1057 = vshrl.u32 683565275, %v1056
        %v1058 = vshll.u32 683565275, %v1055
        %v1059 = vshrl.u32 2475754826, %v1056
        %v1060 = vor.u32 %v1058, %v1059
        %v1061 = vshll.u32 2475754826, %v1055
        %v1062 = vshrl.u32 2131351028, %v1056
        %v1063 = vor.u32 %v1061, %v1062
        %v1064 = vshll.u32 2131351028, %v1055
        %v1065 = vshrl.u32 2102212464, %v1056
        %v1066 = vor.u32 %v1064, %v1065
        %v1067 = vshll.u32 2102212464, %v1055
        %v1068 = vshrl.u32 920167782, %v1056
        %v1069 = vor.u32 %v1067, %v1068
        %v1070 = vshll.u32 920167782, %v1055
        %v1071 = vshrl.u32 1326507024, %v1056
        %v1072 = vor.u32 %v1070, %v1071
        %vm1073 = vcmp.lt.s32.totalorder %v1054, 1
        %vm1074 = vcmp.lt.s32.totalorder %v1054, 2
        %vm1075 = vcmp.lt.s32.totalorder %v1054, 3
        %vm1076 = vcmp.lt.s32.totalorder %v1054, 4
        %v1077 = vsel %vm1073, %v1057, %v1060
        %v1078 = vsel %vm1076, %v1066, 2102212464
        %v1079 = vsel %vm1075, %v1063, %v1078
        %v1080 = vsel %vm1074, %v1077, %v1079
        %v1081 = vsel %vm1073, %v1060, %v1063
        %v1082 = vsel %vm1076, %v1069, 920167782
        %v1083 = vsel %vm1075, %v1066, %v1082
        %v1084 = vsel %vm1074, %v1081, %v1083
        %v1085 = vsel %vm1073, %v1063, %v1066
        %v1086 = vsel %vm1076, %v1072, 1326507024
        %v1087 = vsel %vm1075, %v1069, %v1086
        %v1088 = vsel %vm1074, %v1085, %v1087
        %v1089 = vshll.u32 %v1049, 8
        %v1090 = vmul.u32.u64.compose %v1089, %v1088
        %v1091 = vextract.low.u32 %v1090
        %v1092 = vextract.high.u32 %v1090
        %v1093 = vmul.u32.u64.compose %v1089, %v1084
        %v1094 = vextract.low.u32 %v1093
        %v1095 = vextract.high.u32 %v1093
        %v1096 = vmul.u32 %v1089, %v1080
        %v1097 = vadd.s32 %v1092, %v1094
        %vm1098 = vc.u32 %v1092, %v1094
        %v1099 = vadd.s32 %v1095, 1
        %v1100 = vsel %vm1098, %v1099, %v1095
        %v1101 = vadd.s32 %v1096, %v1100
        %v1102 = vadd.s32 %v1101, 536870912
        %v1103 = vshrl.u32 %v1102, 30
        %v1104 = vshll.u32 %v1103, 30
        %v1105 = vsub.s32 %v1101, %v1104
        %vm1106 = vcmp.lt.s32.totalorder %v1105, 0
        %v1107 = vsub.s32 0, %v1105
        %v1108 = vsel %vm1106, %v1107, %v1105
        %v1109 = vclz %v1108
        %v1110 = vsub.s32 %v1109, 2
        %vm1111 = vcmp.gt.s32.totalorder 0, %v1110
        %v1112 = vsel %vm1111, 0, %v1110
        %v1113 = vsub.s32 32, %v1112
        %v1114 = vshll.u32 %v1105, %v1112
        %v1115 = vshrl.u32 %v1097, %v1113
        %v1116 = vor.u32 %v1114, %v1115
        %v1117 = vsub.s32 4294967266, %v1112
        %v1118 = vadd.s32 %v1117, 127
        %v1119 = vshll.u32 %v1118, 23
        %v1120 = vor.u32 4788187, %v1119
        %v1121 = vand.u32 2147483647, %v1120
        %v1123 = vcvt.s32.f32 %v1116
        %v1124 = vmul.f32 %v1123, %v1121
        %v1125 = vxor.u32 %v1124, 2147483648
        %v1126 = vsel %vm1043, %v1125, %v1124
        %v1127 = vsub.s32 4, %v1103
        %v1128 = vsel %vm1043, %v1127, %v1103
        %v1129 = vsel %vm1042, %v1039, %v1126
        %v1130 = vsel %vm1042, 0, %v1128
        %v1131 = vcosq.f32.pop %v1129
        %v1132 = vsinq.f32.pop %v1129
        %vm1133 = vweird.f32 %v1039
        %v1134 = vadd.s32 %v1130, 3
        %v1135 = vand.u32 %v1134, 3
        %vm1136 = vcmp.lt.s32.totalorder %v1135, 2
        %vm1137 = vcmp.eq.s32.totalorder %v1135, 0
        %v1138 = vxor.u32 %v1132, 2147483648
        %v1139 = vsel %vm1137, %v1131, %v1138
        %vm1140 = vcmp.eq.s32.totalorder %v1135, 2
        %v1141 = vxor.u32 %v1131, 2147483648
        %v1142 = vsel %vm1140, %v1141, %v1132
        %v1143 = vsel %vm1136, %v1139, %v1142
        %v1144 = vsel %vm1133, nan, %v1143
        %v1145 = vand.u32 2147483647, %v1040
        %vm1146 = vcmp.le.f32.partialorder %v1145, 0.7853982
        %vm1147 = vcmp.lt.s32.totalorder %v1040, 0
        %v1148 = vand.u32 %v1040, 2139095040
        %v1149 = vshrl.u32 %v1148, 23
        %v1150 = vsub.s32 %v1149, 127
        %v1151 = vand.u32 2147483647, %v1040
        %v1152 = vand.u32 %v1151, 8388607
        %v1153 = vor.u32 %v1152, 8388608
        %v1154 = vsub.s32 0, %v1153
        %v1155 = vadd.s32 %v1150, 1
        %vm1156 = vcmp.gt.s32.totalorder %v1155, 0
        %v1157 = vsel %vm1156, %v1155, 0
        %v1158 = vshrl.u32 %v1157, 5
        %v1159 = vand.u32 %v1157, 31
        %v1160 = vsub.s32 32, %v1159
        %v1161 = vshrl.u32 683565275, %v1160
        %v1162 = vshll.u32 683565275, %v1159
        %v1163 = vshrl.u32 2475754826, %v1160
        %v1164 = vor.u32 %v1162, %v1163
        %v1165 = vshll.u32 2475754826, %v1159
        %v1166 = vshrl.u32 2131351028, %v1160
        %v1167 = vor.u32 %v1165, %v1166
        %v1168 = vshll.u32 2131351028, %v1159
        %v1169 = vshrl.u32 2102212464, %v1160
        %v1170 = vor.u32 %v1168, %v1169
        %v1171 = vshll.u32 2102212464, %v1159
        %v1172 = vshrl.u32 920167782, %v1160
        %v1173 = vor.u32 %v1171, %v1172
        %v1174 = vshll.u32 920167782, %v1159
        %v1175 = vshrl.u32 1326507024, %v1160
        %v1176 = vor.u32 %v1174, %v1175
        %vm1177 = vcmp.lt.s32.totalorder %v1158, 1
        %vm1178 = vcmp.lt.s32.totalorder %v1158, 2
        %vm1179 = vcmp.lt.s32.totalorder %v1158, 3
        %vm1180 = vcmp.lt.s32.totalorder %v1158, 4
        %v1181 = vsel %vm1177, %v1161, %v1164
        %v1182 = vsel %vm1180, %v1170, 2102212464
        %v1183 = vsel %vm1179, %v1167, %v1182
        %v1184 = vsel %vm1178, %v1181, %v1183
        %v1185 = vsel %vm1177, %v1164, %v1167
        %v1186 = vsel %vm1180, %v1173, 920167782
        %v1187 = vsel %vm1179, %v1170, %v1186
        %v1188 = vsel %vm1178, %v1185, %v1187
        %v1189 = vsel %vm1177, %v1167, %v1170
        %v1190 = vsel %vm1180, %v1176, 1326507024
        %v1191 = vsel %vm1179, %v1173, %v1190
        %v1192 = vsel %vm1178, %v1189, %v1191
        %v1193 = vshll.u32 %v1153, 8
        %v1194 = vmul.u32.u64.compose %v1193, %v1192
        %v1195 = vextract.low.u32 %v1194
        %v1196 = vextract.high.u32 %v1194
        %v1197 = vmul.u32.u64.compose %v1193, %v1188
        %v1198 = vextract.low.u32 %v1197
        %v1199 = vextract.high.u32 %v1197
        %v1200 = vmul.u32 %v1193, %v1184
        %v1201 = vadd.s32 %v1196, %v1198
        %vm1202 = vc.u32 %v1196, %v1198
        %v1203 = vadd.s32 %v1199, 1
        %v1204 = vsel %vm1202, %v1203, %v1199
        %v1205 = vadd.s32 %v1200, %v1204
        %v1206 = vadd.s32 %v1205, 536870912
        %v1207 = vshrl.u32 %v1206, 30
        %v1208 = vshll.u32 %v1207, 30
        %v1209 = vsub.s32 %v1205, %v1208
        %vm1210 = vcmp.lt.s32.totalorder %v1209, 0
        %v1211 = vsub.s32 0, %v1209
        %v1212 = vsel %vm1210, %v1211, %v1209
        %v1213 = vclz %v1212
        %v1214 = vsub.s32 %v1213, 2
        %vm1215 = vcmp.gt.s32.totalorder 0, %v1214
        %v1216 = vsel %vm1215, 0, %v1214
        %v1217 = vsub.s32 32, %v1216
        %v1218 = vshll.u32 %v1209, %v1216
        %v1219 = vshrl.u32 %v1201, %v1217
        %v1220 = vor.u32 %v1218, %v1219
        %v1221 = vsub.s32 4294967266, %v1216
        %v1222 = vadd.s32 %v1221, 127
        %v1223 = vshll.u32 %v1222, 23
        %v1224 = vor.u32 4788187, %v1223
        %v1225 = vand.u32 2147483647, %v1224
        %v1227 = vcvt.s32.f32 %v1220
        %v1228 = vmul.f32 %v1227, %v1225
        %v1229 = vxor.u32 %v1228, 2147483648
        %v1230 = vsel %vm1147, %v1229, %v1228
        %v1231 = vsub.s32 4, %v1207
        %v1232 = vsel %vm1147, %v1231, %v1207
        %v1233 = vsel %vm1146, %v1040, %v1230
        %v1234 = vsel %vm1146, 0, %v1232
        %v1235 = vcosq.f32.pop %v1233
        %v1236 = vsinq.f32.pop %v1233
        %vm1237 = vweird.f32 %v1040
        %v1238 = vadd.s32 %v1234, 3
        %v1239 = vand.u32 %v1238, 3
        %vm1240 = vcmp.lt.s32.totalorder %v1239, 2
        %vm1241 = vcmp.eq.s32.totalorder %v1239, 0
        %v1242 = vxor.u32 %v1236, 2147483648
        %v1243 = vsel %vm1241, %v1235, %v1242
        %vm1244 = vcmp.eq.s32.totalorder %v1239, 2
        %v1245 = vxor.u32 %v1235, 2147483648
        %v1246 = vsel %vm1244, %v1245, %v1236
        %v1247 = vsel %vm1240, %v1243, %v1246
        %v1248 = vsel %vm1237, nan, %v1247
        %v1251 = vcombine.high %v1144, %v1144
        %v1252 = vcombine.high %v1248, %v1248
        %v1253 = vrot.slane %v1144, 1
        %v1254 = vrot.slane %v1251, 1
        %v1255 = vrot.slane %v1248, 1
        %v1256 = vrot.slane %v1252, 1
        %1261 = vst [vmem:[%s132 + $0x20] sm:$0x80] %v1253
        %1262 = vst [vmem:[%s132 + $0x28] sm:$0x80] %v1254
        %1263 = vst [vmem:[%s132 + $0x30] sm:$0x80] %v1255
        %1264 = vst [vmem:[%s132 + $0x38] sm:$0x80] %v1256
        %1265 = vst [vmem:[%s132 + $0x40] sm:$0x3] %v1253
        %1266 = vst [vmem:[%s132 + $0x48] sm:$0x3] %v1254
        %1267 = vst [vmem:[%s132 + $0x50] sm:$0x3] %v1255
        %1268 = vst [vmem:[%s132 + $0x58] sm:$0x3] %v1256
        %v1269 = vand.u32 2147483647, %v1039
        %vm1270 = vcmp.le.f32.partialorder %v1269, 0.7853982
        %vm1271 = vcmp.lt.s32.totalorder %v1039, 0
        %v1272 = vand.u32 %v1039, 2139095040
        %v1273 = vshrl.u32 %v1272, 23
        %v1274 = vsub.s32 %v1273, 127
        %v1275 = vand.u32 2147483647, %v1039
        %v1276 = vand.u32 %v1275, 8388607
        %v1277 = vor.u32 %v1276, 8388608
        %v1278 = vsub.s32 0, %v1277
        %v1279 = vadd.s32 %v1274, 1
        %vm1280 = vcmp.gt.s32.totalorder %v1279, 0
        %v1281 = vsel %vm1280, %v1279, 0
        %v1282 = vshrl.u32 %v1281, 5
        %v1283 = vand.u32 %v1281, 31
        %v1284 = vsub.s32 32, %v1283
        %v1285 = vshrl.u32 683565275, %v1284
        %v1286 = vshll.u32 683565275, %v1283
        %v1287 = vshrl.u32 2475754826, %v1284
        %v1288 = vor.u32 %v1286, %v1287
        %v1289 = vshll.u32 2475754826, %v1283
        %v1290 = vshrl.u32 2131351028, %v1284
        %v1291 = vor.u32 %v1289, %v1290
        %v1292 = vshll.u32 2131351028, %v1283
        %v1293 = vshrl.u32 2102212464, %v1284
        %v1294 = vor.u32 %v1292, %v1293
        %v1295 = vshll.u32 2102212464, %v1283
        %v1296 = vshrl.u32 920167782, %v1284
        %v1297 = vor.u32 %v1295, %v1296
        %v1298 = vshll.u32 920167782, %v1283
        %v1299 = vshrl.u32 1326507024, %v1284
        %v1300 = vor.u32 %v1298, %v1299
        %vm1301 = vcmp.lt.s32.totalorder %v1282, 1
        %vm1302 = vcmp.lt.s32.totalorder %v1282, 2
        %vm1303 = vcmp.lt.s32.totalorder %v1282, 3
        %vm1304 = vcmp.lt.s32.totalorder %v1282, 4
        %v1305 = vsel %vm1301, %v1285, %v1288
        %v1306 = vsel %vm1304, %v1294, 2102212464
        %v1307 = vsel %vm1303, %v1291, %v1306
        %v1308 = vsel %vm1302, %v1305, %v1307
        %v1309 = vsel %vm1301, %v1288, %v1291
        %v1310 = vsel %vm1304, %v1297, 920167782
        %v1311 = vsel %vm1303, %v1294, %v1310
        %v1312 = vsel %vm1302, %v1309, %v1311
        %v1313 = vsel %vm1301, %v1291, %v1294
        %v1314 = vsel %vm1304, %v1300, 1326507024
        %v1315 = vsel %vm1303, %v1297, %v1314
        %v1316 = vsel %vm1302, %v1313, %v1315
        %v1317 = vshll.u32 %v1277, 8
        %v1318 = vmul.u32.u64.compose %v1317, %v1316
        %v1319 = vextract.low.u32 %v1318
        %v1320 = vextract.high.u32 %v1318
        %v1321 = vmul.u32.u64.compose %v1317, %v1312
        %v1322 = vextract.low.u32 %v1321
        %v1323 = vextract.high.u32 %v1321
        %v1324 = vmul.u32 %v1317, %v1308
        %v1325 = vadd.s32 %v1320, %v1322
        %vm1326 = vc.u32 %v1320, %v1322
        %v1327 = vadd.s32 %v1323, 1
        %v1328 = vsel %vm1326, %v1327, %v1323
        %v1329 = vadd.s32 %v1324, %v1328
        %v1330 = vadd.s32 %v1329, 536870912
        %v1331 = vshrl.u32 %v1330, 30
        %v1332 = vshll.u32 %v1331, 30
        %v1333 = vsub.s32 %v1329, %v1332
        %vm1334 = vcmp.lt.s32.totalorder %v1333, 0
        %v1335 = vsub.s32 0, %v1333
        %v1336 = vsel %vm1334, %v1335, %v1333
        %v1337 = vclz %v1336
        %v1338 = vsub.s32 %v1337, 2
        %vm1339 = vcmp.gt.s32.totalorder 0, %v1338
        %v1340 = vsel %vm1339, 0, %v1338
        %v1341 = vsub.s32 32, %v1340
        %v1342 = vshll.u32 %v1333, %v1340
        %v1343 = vshrl.u32 %v1325, %v1341
        %v1344 = vor.u32 %v1342, %v1343
        %v1345 = vsub.s32 4294967266, %v1340
        %v1346 = vadd.s32 %v1345, 127
        %v1347 = vshll.u32 %v1346, 23
        %v1348 = vor.u32 4788187, %v1347
        %v1349 = vand.u32 2147483647, %v1348
        %v1351 = vcvt.s32.f32 %v1344
        %v1352 = vmul.f32 %v1351, %v1349
        %v1353 = vxor.u32 %v1352, 2147483648
        %v1354 = vsel %vm1271, %v1353, %v1352
        %v1355 = vsub.s32 4, %v1331
        %v1356 = vsel %vm1271, %v1355, %v1331
        %v1357 = vsel %vm1270, %v1039, %v1354
        %v1358 = vsel %vm1270, 0, %v1356
        %v1359 = vcosq.f32.pop %v1357
        %v1360 = vsinq.f32.pop %v1357
        %vm1361 = vweird.f32 %v1039
        %v1362 = vand.u32 %v1358, 3
        %vm1363 = vcmp.lt.s32.totalorder %v1362, 2
        %vm1364 = vcmp.eq.s32.totalorder %v1362, 0
        %v1365 = vxor.u32 %v1360, 2147483648
        %v1366 = vsel %vm1364, %v1359, %v1365
        %vm1367 = vcmp.eq.s32.totalorder %v1362, 2
        %v1368 = vxor.u32 %v1359, 2147483648
        %v1369 = vsel %vm1367, %v1368, %v1360
        %v1370 = vsel %vm1363, %v1366, %v1369
        %v1371 = vsel %vm1361, nan, %v1370
        %v1372 = vand.u32 2147483647, %v1040
        %vm1373 = vcmp.le.f32.partialorder %v1372, 0.7853982
        %vm1374 = vcmp.lt.s32.totalorder %v1040, 0
        %v1375 = vand.u32 %v1040, 2139095040
        %v1376 = vshrl.u32 %v1375, 23
        %v1377 = vsub.s32 %v1376, 127
        %v1378 = vand.u32 2147483647, %v1040
        %v1379 = vand.u32 %v1378, 8388607
        %v1380 = vor.u32 %v1379, 8388608
        %v1381 = vsub.s32 0, %v1380
        %v1382 = vadd.s32 %v1377, 1
        %vm1383 = vcmp.gt.s32.totalorder %v1382, 0
        %v1384 = vsel %vm1383, %v1382, 0
        %v1385 = vshrl.u32 %v1384, 5
        %v1386 = vand.u32 %v1384, 31
        %v1387 = vsub.s32 32, %v1386
        %v1388 = vshrl.u32 683565275, %v1387
        %v1389 = vshll.u32 683565275, %v1386
        %v1390 = vshrl.u32 2475754826, %v1387
        %v1391 = vor.u32 %v1389, %v1390
        %v1392 = vshll.u32 2475754826, %v1386
        %v1393 = vshrl.u32 2131351028, %v1387
        %v1394 = vor.u32 %v1392, %v1393
        %v1395 = vshll.u32 2131351028, %v1386
        %v1396 = vshrl.u32 2102212464, %v1387
        %v1397 = vor.u32 %v1395, %v1396
        %v1398 = vshll.u32 2102212464, %v1386
        %v1399 = vshrl.u32 920167782, %v1387
        %v1400 = vor.u32 %v1398, %v1399
        %v1401 = vshll.u32 920167782, %v1386
        %v1402 = vshrl.u32 1326507024, %v1387
        %v1403 = vor.u32 %v1401, %v1402
        %vm1404 = vcmp.lt.s32.totalorder %v1385, 1
        %vm1405 = vcmp.lt.s32.totalorder %v1385, 2
        %vm1406 = vcmp.lt.s32.totalorder %v1385, 3
        %vm1407 = vcmp.lt.s32.totalorder %v1385, 4
        %v1408 = vsel %vm1404, %v1388, %v1391
        %v1409 = vsel %vm1407, %v1397, 2102212464
        %v1410 = vsel %vm1406, %v1394, %v1409
        %v1411 = vsel %vm1405, %v1408, %v1410
        %v1412 = vsel %vm1404, %v1391, %v1394
        %v1413 = vsel %vm1407, %v1400, 920167782
        %v1414 = vsel %vm1406, %v1397, %v1413
        %v1415 = vsel %vm1405, %v1412, %v1414
        %v1416 = vsel %vm1404, %v1394, %v1397
        %v1417 = vsel %vm1407, %v1403, 1326507024
        %v1418 = vsel %vm1406, %v1400, %v1417
        %v1419 = vsel %vm1405, %v1416, %v1418
        %v1420 = vshll.u32 %v1380, 8
        %v1421 = vmul.u32.u64.compose %v1420, %v1419
        %v1422 = vextract.low.u32 %v1421
        %v1423 = vextract.high.u32 %v1421
        %v1424 = vmul.u32.u64.compose %v1420, %v1415
        %v1425 = vextract.low.u32 %v1424
        %v1426 = vextract.high.u32 %v1424
        %v1427 = vmul.u32 %v1420, %v1411
        %v1428 = vadd.s32 %v1423, %v1425
        %vm1429 = vc.u32 %v1423, %v1425
        %v1430 = vadd.s32 %v1426, 1
        %v1431 = vsel %vm1429, %v1430, %v1426
        %v1432 = vadd.s32 %v1427, %v1431
        %v1433 = vadd.s32 %v1432, 536870912
        %v1434 = vshrl.u32 %v1433, 30
        %v1435 = vshll.u32 %v1434, 30
        %v1436 = vsub.s32 %v1432, %v1435
        %vm1437 = vcmp.lt.s32.totalorder %v1436, 0
        %v1438 = vsub.s32 0, %v1436
        %v1439 = vsel %vm1437, %v1438, %v1436
        %v1440 = vclz %v1439
        %v1441 = vsub.s32 %v1440, 2
        %vm1442 = vcmp.gt.s32.totalorder 0, %v1441
        %v1443 = vsel %vm1442, 0, %v1441
        %v1444 = vsub.s32 32, %v1443
        %v1445 = vshll.u32 %v1436, %v1443
        %v1446 = vshrl.u32 %v1428, %v1444
        %v1447 = vor.u32 %v1445, %v1446
        %v1448 = vsub.s32 4294967266, %v1443
        %v1449 = vadd.s32 %v1448, 127
        %v1450 = vshll.u32 %v1449, 23
        %v1451 = vor.u32 4788187, %v1450
        %v1452 = vand.u32 2147483647, %v1451
        %v1454 = vcvt.s32.f32 %v1447
        %v1455 = vmul.f32 %v1454, %v1452
        %v1456 = vxor.u32 %v1455, 2147483648
        %v1457 = vsel %vm1374, %v1456, %v1455
        %v1458 = vsub.s32 4, %v1434
        %v1459 = vsel %vm1374, %v1458, %v1434
        %v1460 = vsel %vm1373, %v1040, %v1457
        %v1461 = vsel %vm1373, 0, %v1459
        %v1462 = vcosq.f32.pop %v1460
        %v1463 = vsinq.f32.pop %v1460
        %vm1464 = vweird.f32 %v1040
        %v1465 = vand.u32 %v1461, 3
        %vm1466 = vcmp.lt.s32.totalorder %v1465, 2
        %vm1467 = vcmp.eq.s32.totalorder %v1465, 0
        %v1468 = vxor.u32 %v1463, 2147483648
        %v1469 = vsel %vm1467, %v1462, %v1468
        %vm1470 = vcmp.eq.s32.totalorder %v1465, 2
        %v1471 = vxor.u32 %v1462, 2147483648
        %v1472 = vsel %vm1470, %v1471, %v1463
        %v1473 = vsel %vm1466, %v1469, %v1472
        %v1474 = vsel %vm1464, nan, %v1473
        %v1477 = vcombine.high %v1371, %v1371
        %v1478 = vcombine.high %v1474, %v1474
        %v1479 = vrot.slane %v1371, 6
        %v1480 = vrot.slane %v1477, 6
        %v1481 = vrot.slane %v1474, 6
        %v1482 = vrot.slane %v1478, 6
        %1487 = vst [vmem:[%s132 + $0x40] sm:$0x1c] %v1479
        %1488 = vst [vmem:[%s132 + $0x48] sm:$0x1c] %v1480
        %1489 = vst [vmem:[%s132 + $0x50] sm:$0x1c] %v1481
        %1490 = vst [vmem:[%s132 + $0x58] sm:$0x1c] %v1482
        %v1491 = vmul.f32 %v135, 8.0
        %v1492 = vmul.f32 %v136, 8.0
        %v1493 = vand.u32 2147483647, %v1491
        %vm1494 = vcmp.le.f32.partialorder %v1493, 0.7853982
        %vm1495 = vcmp.lt.s32.totalorder %v1491, 0
        %v1496 = vand.u32 %v1491, 2139095040
        %v1497 = vshrl.u32 %v1496, 23
        %v1498 = vsub.s32 %v1497, 127
        %v1499 = vand.u32 2147483647, %v1491
        %v1500 = vand.u32 %v1499, 8388607
        %v1501 = vor.u32 %v1500, 8388608
        %v1502 = vsub.s32 0, %v1501
        %v1503 = vadd.s32 %v1498, 1
        %vm1504 = vcmp.gt.s32.totalorder %v1503, 0
        %v1505 = vsel %vm1504, %v1503, 0
        %v1506 = vshrl.u32 %v1505, 5
        %v1507 = vand.u32 %v1505, 31
        %v1508 = vsub.s32 32, %v1507
        %v1509 = vshrl.u32 683565275, %v1508
        %v1510 = vshll.u32 683565275, %v1507
        %v1511 = vshrl.u32 2475754826, %v1508
        %v1512 = vor.u32 %v1510, %v1511
        %v1513 = vshll.u32 2475754826, %v1507
        %v1514 = vshrl.u32 2131351028, %v1508
        %v1515 = vor.u32 %v1513, %v1514
        %v1516 = vshll.u32 2131351028, %v1507
        %v1517 = vshrl.u32 2102212464, %v1508
        %v1518 = vor.u32 %v1516, %v1517
        %v1519 = vshll.u32 2102212464, %v1507
        %v1520 = vshrl.u32 920167782, %v1508
        %v1521 = vor.u32 %v1519, %v1520
        %v1522 = vshll.u32 920167782, %v1507
        %v1523 = vshrl.u32 1326507024, %v1508
        %v1524 = vor.u32 %v1522, %v1523
        %vm1525 = vcmp.lt.s32.totalorder %v1506, 1
        %vm1526 = vcmp.lt.s32.totalorder %v1506, 2
        %vm1527 = vcmp.lt.s32.totalorder %v1506, 3
        %vm1528 = vcmp.lt.s32.totalorder %v1506, 4
        %v1529 = vsel %vm1525, %v1509, %v1512
        %v1530 = vsel %vm1528, %v1518, 2102212464
        %v1531 = vsel %vm1527, %v1515, %v1530
        %v1532 = vsel %vm1526, %v1529, %v1531
        %v1533 = vsel %vm1525, %v1512, %v1515
        %v1534 = vsel %vm1528, %v1521, 920167782
        %v1535 = vsel %vm1527, %v1518, %v1534
        %v1536 = vsel %vm1526, %v1533, %v1535
        %v1537 = vsel %vm1525, %v1515, %v1518
        %v1538 = vsel %vm1528, %v1524, 1326507024
        %v1539 = vsel %vm1527, %v1521, %v1538
        %v1540 = vsel %vm1526, %v1537, %v1539
        %v1541 = vshll.u32 %v1501, 8
        %v1542 = vmul.u32.u64.compose %v1541, %v1540
        %v1543 = vextract.low.u32 %v1542
        %v1544 = vextract.high.u32 %v1542
        %v1545 = vmul.u32.u64.compose %v1541, %v1536
        %v1546 = vextract.low.u32 %v1545
        %v1547 = vextract.high.u32 %v1545
        %v1548 = vmul.u32 %v1541, %v1532
        %v1549 = vadd.s32 %v1544, %v1546
        %vm1550 = vc.u32 %v1544, %v1546
        %v1551 = vadd.s32 %v1547, 1
        %v1552 = vsel %vm1550, %v1551, %v1547
        %v1553 = vadd.s32 %v1548, %v1552
        %v1554 = vadd.s32 %v1553, 536870912
        %v1555 = vshrl.u32 %v1554, 30
        %v1556 = vshll.u32 %v1555, 30
        %v1557 = vsub.s32 %v1553, %v1556
        %vm1558 = vcmp.lt.s32.totalorder %v1557, 0
        %v1559 = vsub.s32 0, %v1557
        %v1560 = vsel %vm1558, %v1559, %v1557
        %v1561 = vclz %v1560
        %v1562 = vsub.s32 %v1561, 2
        %vm1563 = vcmp.gt.s32.totalorder 0, %v1562
        %v1564 = vsel %vm1563, 0, %v1562
        %v1565 = vsub.s32 32, %v1564
        %v1566 = vshll.u32 %v1557, %v1564
        %v1567 = vshrl.u32 %v1549, %v1565
        %v1568 = vor.u32 %v1566, %v1567
        %v1569 = vsub.s32 4294967266, %v1564
        %v1570 = vadd.s32 %v1569, 127
        %v1571 = vshll.u32 %v1570, 23
        %v1572 = vor.u32 4788187, %v1571
        %v1573 = vand.u32 2147483647, %v1572
        %v1575 = vcvt.s32.f32 %v1568
        %v1576 = vmul.f32 %v1575, %v1573
        %v1577 = vxor.u32 %v1576, 2147483648
        %v1578 = vsel %vm1495, %v1577, %v1576
        %v1579 = vsub.s32 4, %v1555
        %v1580 = vsel %vm1495, %v1579, %v1555
        %v1581 = vsel %vm1494, %v1491, %v1578
        %v1582 = vsel %vm1494, 0, %v1580
        %v1583 = vcosq.f32.pop %v1581
        %v1584 = vsinq.f32.pop %v1581
        %vm1585 = vweird.f32 %v1491
        %v1586 = vadd.s32 %v1582, 3
        %v1587 = vand.u32 %v1586, 3
        %vm1588 = vcmp.lt.s32.totalorder %v1587, 2
        %vm1589 = vcmp.eq.s32.totalorder %v1587, 0
        %v1590 = vxor.u32 %v1584, 2147483648
        %v1591 = vsel %vm1589, %v1583, %v1590
        %vm1592 = vcmp.eq.s32.totalorder %v1587, 2
        %v1593 = vxor.u32 %v1583, 2147483648
        %v1594 = vsel %vm1592, %v1593, %v1584
        %v1595 = vsel %vm1588, %v1591, %v1594
        %v1596 = vsel %vm1585, nan, %v1595
        %v1597 = vand.u32 2147483647, %v1492
        %vm1598 = vcmp.le.f32.partialorder %v1597, 0.7853982
        %vm1599 = vcmp.lt.s32.totalorder %v1492, 0
        %v1600 = vand.u32 %v1492, 2139095040
        %v1601 = vshrl.u32 %v1600, 23
        %v1602 = vsub.s32 %v1601, 127
        %v1603 = vand.u32 2147483647, %v1492
        %v1604 = vand.u32 %v1603, 8388607
        %v1605 = vor.u32 %v1604, 8388608
        %v1606 = vsub.s32 0, %v1605
        %v1607 = vadd.s32 %v1602, 1
        %vm1608 = vcmp.gt.s32.totalorder %v1607, 0
        %v1609 = vsel %vm1608, %v1607, 0
        %v1610 = vshrl.u32 %v1609, 5
        %v1611 = vand.u32 %v1609, 31
        %v1612 = vsub.s32 32, %v1611
        %v1613 = vshrl.u32 683565275, %v1612
        %v1614 = vshll.u32 683565275, %v1611
        %v1615 = vshrl.u32 2475754826, %v1612
        %v1616 = vor.u32 %v1614, %v1615
        %v1617 = vshll.u32 2475754826, %v1611
        %v1618 = vshrl.u32 2131351028, %v1612
        %v1619 = vor.u32 %v1617, %v1618
        %v1620 = vshll.u32 2131351028, %v1611
        %v1621 = vshrl.u32 2102212464, %v1612
        %v1622 = vor.u32 %v1620, %v1621
        %v1623 = vshll.u32 2102212464, %v1611
        %v1624 = vshrl.u32 920167782, %v1612
        %v1625 = vor.u32 %v1623, %v1624
        %v1626 = vshll.u32 920167782, %v1611
        %v1627 = vshrl.u32 1326507024, %v1612
        %v1628 = vor.u32 %v1626, %v1627
        %vm1629 = vcmp.lt.s32.totalorder %v1610, 1
        %vm1630 = vcmp.lt.s32.totalorder %v1610, 2
        %vm1631 = vcmp.lt.s32.totalorder %v1610, 3
        %vm1632 = vcmp.lt.s32.totalorder %v1610, 4
        %v1633 = vsel %vm1629, %v1613, %v1616
        %v1634 = vsel %vm1632, %v1622, 2102212464
        %v1635 = vsel %vm1631, %v1619, %v1634
        %v1636 = vsel %vm1630, %v1633, %v1635
        %v1637 = vsel %vm1629, %v1616, %v1619
        %v1638 = vsel %vm1632, %v1625, 920167782
        %v1639 = vsel %vm1631, %v1622, %v1638
        %v1640 = vsel %vm1630, %v1637, %v1639
        %v1641 = vsel %vm1629, %v1619, %v1622
        %v1642 = vsel %vm1632, %v1628, 1326507024
        %v1643 = vsel %vm1631, %v1625, %v1642
        %v1644 = vsel %vm1630, %v1641, %v1643
        %v1645 = vshll.u32 %v1605, 8
        %v1646 = vmul.u32.u64.compose %v1645, %v1644
        %v1647 = vextract.low.u32 %v1646
        %v1648 = vextract.high.u32 %v1646
        %v1649 = vmul.u32.u64.compose %v1645, %v1640
        %v1650 = vextract.low.u32 %v1649
        %v1651 = vextract.high.u32 %v1649
        %v1652 = vmul.u32 %v1645, %v1636
        %v1653 = vadd.s32 %v1648, %v1650
        %vm1654 = vc.u32 %v1648, %v1650
        %v1655 = vadd.s32 %v1651, 1
        %v1656 = vsel %vm1654, %v1655, %v1651
        %v1657 = vadd.s32 %v1652, %v1656
        %v1658 = vadd.s32 %v1657, 536870912
        %v1659 = vshrl.u32 %v1658, 30
        %v1660 = vshll.u32 %v1659, 30
        %v1661 = vsub.s32 %v1657, %v1660
        %vm1662 = vcmp.lt.s32.totalorder %v1661, 0
        %v1663 = vsub.s32 0, %v1661
        %v1664 = vsel %vm1662, %v1663, %v1661
        %v1665 = vclz %v1664
        %v1666 = vsub.s32 %v1665, 2
        %vm1667 = vcmp.gt.s32.totalorder 0, %v1666
        %v1668 = vsel %vm1667, 0, %v1666
        %v1669 = vsub.s32 32, %v1668
        %v1670 = vshll.u32 %v1661, %v1668
        %v1671 = vshrl.u32 %v1653, %v1669
        %v1672 = vor.u32 %v1670, %v1671
        %v1673 = vsub.s32 4294967266, %v1668
        %v1674 = vadd.s32 %v1673, 127
        %v1675 = vshll.u32 %v1674, 23
        %v1676 = vor.u32 4788187, %v1675
        %v1677 = vand.u32 2147483647, %v1676
        %v1679 = vcvt.s32.f32 %v1672
        %v1680 = vmul.f32 %v1679, %v1677
        %v1681 = vxor.u32 %v1680, 2147483648
        %v1682 = vsel %vm1599, %v1681, %v1680
        %v1683 = vsub.s32 4, %v1659
        %v1684 = vsel %vm1599, %v1683, %v1659
        %v1685 = vsel %vm1598, %v1492, %v1682
        %v1686 = vsel %vm1598, 0, %v1684
        %v1687 = vcosq.f32.pop %v1685
        %v1688 = vsinq.f32.pop %v1685
        %vm1689 = vweird.f32 %v1492
        %v1690 = vadd.s32 %v1686, 3
        %v1691 = vand.u32 %v1690, 3
        %vm1692 = vcmp.lt.s32.totalorder %v1691, 2
        %vm1693 = vcmp.eq.s32.totalorder %v1691, 0
        %v1694 = vxor.u32 %v1688, 2147483648
        %v1695 = vsel %vm1693, %v1687, %v1694
        %vm1696 = vcmp.eq.s32.totalorder %v1691, 2
        %v1697 = vxor.u32 %v1687, 2147483648
        %v1698 = vsel %vm1696, %v1697, %v1688
        %v1699 = vsel %vm1692, %v1695, %v1698
        %v1700 = vsel %vm1689, nan, %v1699
        %v1703 = vcombine.high %v1596, %v1596
        %v1704 = vcombine.high %v1700, %v1700
        %v1705 = vrot.slane %v1596, 3
        %v1706 = vrot.slane %v1703, 3
        %v1707 = vrot.slane %v1700, 3
        %v1708 = vrot.slane %v1704, 3
        %1713 = vst [vmem:[%s132 + $0x40] sm:$0xe0] %v1705
        %1714 = vst [vmem:[%s132 + $0x48] sm:$0xe0] %v1706
        %1715 = vst [vmem:[%s132 + $0x50] sm:$0xe0] %v1707
        %1716 = vst [vmem:[%s132 + $0x58] sm:$0xe0] %v1708
        %v1717 = vand.u32 2147483647, %v1491
        %vm1718 = vcmp.le.f32.partialorder %v1717, 0.7853982
        %vm1719 = vcmp.lt.s32.totalorder %v1491, 0
        %v1720 = vand.u32 %v1491, 2139095040
        %v1721 = vshrl.u32 %v1720, 23
        %v1722 = vsub.s32 %v1721, 127
        %v1723 = vand.u32 2147483647, %v1491
        %v1724 = vand.u32 %v1723, 8388607
        %v1725 = vor.u32 %v1724, 8388608
        %v1726 = vsub.s32 0, %v1725
        %v1727 = vadd.s32 %v1722, 1
        %vm1728 = vcmp.gt.s32.totalorder %v1727, 0
        %v1729 = vsel %vm1728, %v1727, 0
        %v1730 = vshrl.u32 %v1729, 5
        %v1731 = vand.u32 %v1729, 31
        %v1732 = vsub.s32 32, %v1731
        %v1733 = vshrl.u32 683565275, %v1732
        %v1734 = vshll.u32 683565275, %v1731
        %v1735 = vshrl.u32 2475754826, %v1732
        %v1736 = vor.u32 %v1734, %v1735
        %v1737 = vshll.u32 2475754826, %v1731
        %v1738 = vshrl.u32 2131351028, %v1732
        %v1739 = vor.u32 %v1737, %v1738
        %v1740 = vshll.u32 2131351028, %v1731
        %v1741 = vshrl.u32 2102212464, %v1732
        %v1742 = vor.u32 %v1740, %v1741
        %v1743 = vshll.u32 2102212464, %v1731
        %v1744 = vshrl.u32 920167782, %v1732
        %v1745 = vor.u32 %v1743, %v1744
        %v1746 = vshll.u32 920167782, %v1731
        %v1747 = vshrl.u32 1326507024, %v1732
        %v1748 = vor.u32 %v1746, %v1747
        %vm1749 = vcmp.lt.s32.totalorder %v1730, 1
        %vm1750 = vcmp.lt.s32.totalorder %v1730, 2
        %vm1751 = vcmp.lt.s32.totalorder %v1730, 3
        %vm1752 = vcmp.lt.s32.totalorder %v1730, 4
        %v1753 = vsel %vm1749, %v1733, %v1736
        %v1754 = vsel %vm1752, %v1742, 2102212464
        %v1755 = vsel %vm1751, %v1739, %v1754
        %v1756 = vsel %vm1750, %v1753, %v1755
        %v1757 = vsel %vm1749, %v1736, %v1739
        %v1758 = vsel %vm1752, %v1745, 920167782
        %v1759 = vsel %vm1751, %v1742, %v1758
        %v1760 = vsel %vm1750, %v1757, %v1759
        %v1761 = vsel %vm1749, %v1739, %v1742
        %v1762 = vsel %vm1752, %v1748, 1326507024
        %v1763 = vsel %vm1751, %v1745, %v1762
        %v1764 = vsel %vm1750, %v1761, %v1763
        %v1765 = vshll.u32 %v1725, 8
        %v1766 = vmul.u32.u64.compose %v1765, %v1764
        %v1767 = vextract.low.u32 %v1766
        %v1768 = vextract.high.u32 %v1766
        %v1769 = vmul.u32.u64.compose %v1765, %v1760
        %v1770 = vextract.low.u32 %v1769
        %v1771 = vextract.high.u32 %v1769
        %v1772 = vmul.u32 %v1765, %v1756
        %v1773 = vadd.s32 %v1768, %v1770
        %vm1774 = vc.u32 %v1768, %v1770
        %v1775 = vadd.s32 %v1771, 1
        %v1776 = vsel %vm1774, %v1775, %v1771
        %v1777 = vadd.s32 %v1772, %v1776
        %v1778 = vadd.s32 %v1777, 536870912
        %v1779 = vshrl.u32 %v1778, 30
        %v1780 = vshll.u32 %v1779, 30
        %v1781 = vsub.s32 %v1777, %v1780
        %vm1782 = vcmp.lt.s32.totalorder %v1781, 0
        %v1783 = vsub.s32 0, %v1781
        %v1784 = vsel %vm1782, %v1783, %v1781
        %v1785 = vclz %v1784
        %v1786 = vsub.s32 %v1785, 2
        %vm1787 = vcmp.gt.s32.totalorder 0, %v1786
        %v1788 = vsel %vm1787, 0, %v1786
        %v1789 = vsub.s32 32, %v1788
        %v1790 = vshll.u32 %v1781, %v1788
        %v1791 = vshrl.u32 %v1773, %v1789
        %v1792 = vor.u32 %v1790, %v1791
        %v1793 = vsub.s32 4294967266, %v1788
        %v1794 = vadd.s32 %v1793, 127
        %v1795 = vshll.u32 %v1794, 23
        %v1796 = vor.u32 4788187, %v1795
        %v1797 = vand.u32 2147483647, %v1796
        %v1799 = vcvt.s32.f32 %v1792
        %v1800 = vmul.f32 %v1799, %v1797
        %v1801 = vxor.u32 %v1800, 2147483648
        %v1802 = vsel %vm1719, %v1801, %v1800
        %v1803 = vsub.s32 4, %v1779
        %v1804 = vsel %vm1719, %v1803, %v1779
        %v1805 = vsel %vm1718, %v1491, %v1802
        %v1806 = vsel %vm1718, 0, %v1804
        %v1807 = vcosq.f32.pop %v1805
        %v1808 = vsinq.f32.pop %v1805
        %vm1809 = vweird.f32 %v1491
        %v1810 = vand.u32 %v1806, 3
        %vm1811 = vcmp.lt.s32.totalorder %v1810, 2
        %vm1812 = vcmp.eq.s32.totalorder %v1810, 0
        %v1813 = vxor.u32 %v1808, 2147483648
        %v1814 = vsel %vm1812, %v1807, %v1813
        %vm1815 = vcmp.eq.s32.totalorder %v1810, 2
        %v1816 = vxor.u32 %v1807, 2147483648
        %v1817 = vsel %vm1815, %v1816, %v1808
        %v1818 = vsel %vm1811, %v1814, %v1817
        %v1819 = vsel %vm1809, nan, %v1818
        %v1820 = vand.u32 2147483647, %v1492
        %vm1821 = vcmp.le.f32.partialorder %v1820, 0.7853982
        %vm1822 = vcmp.lt.s32.totalorder %v1492, 0
        %v1823 = vand.u32 %v1492, 2139095040
        %v1824 = vshrl.u32 %v1823, 23
        %v1825 = vsub.s32 %v1824, 127
        %v1826 = vand.u32 2147483647, %v1492
        %v1827 = vand.u32 %v1826, 8388607
        %v1828 = vor.u32 %v1827, 8388608
        %v1829 = vsub.s32 0, %v1828
        %v1830 = vadd.s32 %v1825, 1
        %vm1831 = vcmp.gt.s32.totalorder %v1830, 0
        %v1832 = vsel %vm1831, %v1830, 0
        %v1833 = vshrl.u32 %v1832, 5
        %v1834 = vand.u32 %v1832, 31
        %v1835 = vsub.s32 32, %v1834
        %v1836 = vshrl.u32 683565275, %v1835
        %v1837 = vshll.u32 683565275, %v1834
        %v1838 = vshrl.u32 2475754826, %v1835
        %v1839 = vor.u32 %v1837, %v1838
        %v1840 = vshll.u32 2475754826, %v1834
        %v1841 = vshrl.u32 2131351028, %v1835
        %v1842 = vor.u32 %v1840, %v1841
        %v1843 = vshll.u32 2131351028, %v1834
        %v1844 = vshrl.u32 2102212464, %v1835
        %v1845 = vor.u32 %v1843, %v1844
        %v1846 = vshll.u32 2102212464, %v1834
        %v1847 = vshrl.u32 920167782, %v1835
        %v1848 = vor.u32 %v1846, %v1847
        %v1849 = vshll.u32 920167782, %v1834
        %v1850 = vshrl.u32 1326507024, %v1835
        %v1851 = vor.u32 %v1849, %v1850
        %vm1852 = vcmp.lt.s32.totalorder %v1833, 1
        %vm1853 = vcmp.lt.s32.totalorder %v1833, 2
        %vm1854 = vcmp.lt.s32.totalorder %v1833, 3
        %vm1855 = vcmp.lt.s32.totalorder %v1833, 4
        %v1856 = vsel %vm1852, %v1836, %v1839
        %v1857 = vsel %vm1855, %v1845, 2102212464
        %v1858 = vsel %vm1854, %v1842, %v1857
        %v1859 = vsel %vm1853, %v1856, %v1858
        %v1860 = vsel %vm1852, %v1839, %v1842
        %v1861 = vsel %vm1855, %v1848, 920167782
        %v1862 = vsel %vm1854, %v1845, %v1861
        %v1863 = vsel %vm1853, %v1860, %v1862
        %v1864 = vsel %vm1852, %v1842, %v1845
        %v1865 = vsel %vm1855, %v1851, 1326507024
        %v1866 = vsel %vm1854, %v1848, %v1865
        %v1867 = vsel %vm1853, %v1864, %v1866
        %v1868 = vshll.u32 %v1828, 8
        %v1869 = vmul.u32.u64.compose %v1868, %v1867
        %v1870 = vextract.low.u32 %v1869
        %v1871 = vextract.high.u32 %v1869
        %v1872 = vmul.u32.u64.compose %v1868, %v1863
        %v1873 = vextract.low.u32 %v1872
        %v1874 = vextract.high.u32 %v1872
        %v1875 = vmul.u32 %v1868, %v1859
        %v1876 = vadd.s32 %v1871, %v1873
        %vm1877 = vc.u32 %v1871, %v1873
        %v1878 = vadd.s32 %v1874, 1
        %v1879 = vsel %vm1877, %v1878, %v1874
        %v1880 = vadd.s32 %v1875, %v1879
        %v1881 = vadd.s32 %v1880, 536870912
        %v1882 = vshrl.u32 %v1881, 30
        %v1883 = vshll.u32 %v1882, 30
        %v1884 = vsub.s32 %v1880, %v1883
        %vm1885 = vcmp.lt.s32.totalorder %v1884, 0
        %v1886 = vsub.s32 0, %v1884
        %v1887 = vsel %vm1885, %v1886, %v1884
        %v1888 = vclz %v1887
        %v1889 = vsub.s32 %v1888, 2
        %vm1890 = vcmp.gt.s32.totalorder 0, %v1889
        %v1891 = vsel %vm1890, 0, %v1889
        %v1892 = vsub.s32 32, %v1891
        %v1893 = vshll.u32 %v1884, %v1891
        %v1894 = vshrl.u32 %v1876, %v1892
        %v1895 = vor.u32 %v1893, %v1894
        %v1896 = vsub.s32 4294967266, %v1891
        %v1897 = vadd.s32 %v1896, 127
        %v1898 = vshll.u32 %v1897, 23
        %v1899 = vor.u32 4788187, %v1898
        %v1900 = vand.u32 2147483647, %v1899
        %v1902 = vcvt.s32.f32 %v1895
        %v1903 = vmul.f32 %v1902, %v1900
        %v1904 = vxor.u32 %v1903, 2147483648
        %v1905 = vsel %vm1822, %v1904, %v1903
        %v1906 = vsub.s32 4, %v1882
        %v1907 = vsel %vm1822, %v1906, %v1882
        %v1908 = vsel %vm1821, %v1492, %v1905
        %v1909 = vsel %vm1821, 0, %v1907
        %v1910 = vcosq.f32.pop %v1908
        %v1911 = vsinq.f32.pop %v1908
        %vm1912 = vweird.f32 %v1492
        %v1913 = vand.u32 %v1909, 3
        %vm1914 = vcmp.lt.s32.totalorder %v1913, 2
        %vm1915 = vcmp.eq.s32.totalorder %v1913, 0
        %v1916 = vxor.u32 %v1911, 2147483648
        %v1917 = vsel %vm1915, %v1910, %v1916
        %vm1918 = vcmp.eq.s32.totalorder %v1913, 2
        %v1919 = vxor.u32 %v1910, 2147483648
        %v1920 = vsel %vm1918, %v1919, %v1911
        %v1921 = vsel %vm1914, %v1917, %v1920
        %v1922 = vsel %vm1912, nan, %v1921
        %v1925 = vcombine.high %v1819, %v1819
        %v1926 = vcombine.high %v1922, %v1922
        %1929 = vst [vmem:[%s132 + $0x60] sm:$0x7] %v1819
        %1930 = vst [vmem:[%s132 + $0x68] sm:$0x7] %v1925
        %1931 = vst [vmem:[%s132 + $0x70] sm:$0x7] %v1922
        %1932 = vst [vmem:[%s132 + $0x78] sm:$0x7] %v1926
        %v1933 = vmul.f32 %v135, 16.0
        %v1934 = vmul.f32 %v136, 16.0
        %v1935 = vand.u32 2147483647, %v1933
        %vm1936 = vcmp.le.f32.partialorder %v1935, 0.7853982
        %vm1937 = vcmp.lt.s32.totalorder %v1933, 0
        %v1938 = vand.u32 %v1933, 2139095040
        %v1939 = vshrl.u32 %v1938, 23
        %v1940 = vsub.s32 %v1939, 127
        %v1941 = vand.u32 2147483647, %v1933
        %v1942 = vand.u32 %v1941, 8388607
        %v1943 = vor.u32 %v1942, 8388608
        %v1944 = vsub.s32 0, %v1943
        %v1945 = vadd.s32 %v1940, 1
        %vm1946 = vcmp.gt.s32.totalorder %v1945, 0
        %v1947 = vsel %vm1946, %v1945, 0
        %v1948 = vshrl.u32 %v1947, 5
        %v1949 = vand.u32 %v1947, 31
        %v1950 = vsub.s32 32, %v1949
        %v1951 = vshrl.u32 683565275, %v1950
        %v1952 = vshll.u32 683565275, %v1949
        %v1953 = vshrl.u32 2475754826, %v1950
        %v1954 = vor.u32 %v1952, %v1953
        %v1955 = vshll.u32 2475754826, %v1949
        %v1956 = vshrl.u32 2131351028, %v1950
        %v1957 = vor.u32 %v1955, %v1956
        %v1958 = vshll.u32 2131351028, %v1949
        %v1959 = vshrl.u32 2102212464, %v1950
        %v1960 = vor.u32 %v1958, %v1959
        %v1961 = vshll.u32 2102212464, %v1949
        %v1962 = vshrl.u32 920167782, %v1950
        %v1963 = vor.u32 %v1961, %v1962
        %v1964 = vshll.u32 920167782, %v1949
        %v1965 = vshrl.u32 1326507024, %v1950
        %v1966 = vor.u32 %v1964, %v1965
        %vm1967 = vcmp.lt.s32.totalorder %v1948, 1
        %vm1968 = vcmp.lt.s32.totalorder %v1948, 2
        %vm1969 = vcmp.lt.s32.totalorder %v1948, 3
        %vm1970 = vcmp.lt.s32.totalorder %v1948, 4
        %v1971 = vsel %vm1967, %v1951, %v1954
        %v1972 = vsel %vm1970, %v1960, 2102212464
        %v1973 = vsel %vm1969, %v1957, %v1972
        %v1974 = vsel %vm1968, %v1971, %v1973
        %v1975 = vsel %vm1967, %v1954, %v1957
        %v1976 = vsel %vm1970, %v1963, 920167782
        %v1977 = vsel %vm1969, %v1960, %v1976
        %v1978 = vsel %vm1968, %v1975, %v1977
        %v1979 = vsel %vm1967, %v1957, %v1960
        %v1980 = vsel %vm1970, %v1966, 1326507024
        %v1981 = vsel %vm1969, %v1963, %v1980
        %v1982 = vsel %vm1968, %v1979, %v1981
        %v1983 = vshll.u32 %v1943, 8
        %v1984 = vmul.u32.u64.compose %v1983, %v1982
        %v1985 = vextract.low.u32 %v1984
        %v1986 = vextract.high.u32 %v1984
        %v1987 = vmul.u32.u64.compose %v1983, %v1978
        %v1988 = vextract.low.u32 %v1987
        %v1989 = vextract.high.u32 %v1987
        %v1990 = vmul.u32 %v1983, %v1974
        %v1991 = vadd.s32 %v1986, %v1988
        %vm1992 = vc.u32 %v1986, %v1988
        %v1993 = vadd.s32 %v1989, 1
        %v1994 = vsel %vm1992, %v1993, %v1989
        %v1995 = vadd.s32 %v1990, %v1994
        %v1996 = vadd.s32 %v1995, 536870912
        %v1997 = vshrl.u32 %v1996, 30
        %v1998 = vshll.u32 %v1997, 30
        %v1999 = vsub.s32 %v1995, %v1998
        %vm2000 = vcmp.lt.s32.totalorder %v1999, 0
        %v2001 = vsub.s32 0, %v1999
        %v2002 = vsel %vm2000, %v2001, %v1999
        %v2003 = vclz %v2002
        %v2004 = vsub.s32 %v2003, 2
        %vm2005 = vcmp.gt.s32.totalorder 0, %v2004
        %v2006 = vsel %vm2005, 0, %v2004
        %v2007 = vsub.s32 32, %v2006
        %v2008 = vshll.u32 %v1999, %v2006
        %v2009 = vshrl.u32 %v1991, %v2007
        %v2010 = vor.u32 %v2008, %v2009
        %v2011 = vsub.s32 4294967266, %v2006
        %v2012 = vadd.s32 %v2011, 127
        %v2013 = vshll.u32 %v2012, 23
        %v2014 = vor.u32 4788187, %v2013
        %v2015 = vand.u32 2147483647, %v2014
        %v2017 = vcvt.s32.f32 %v2010
        %v2018 = vmul.f32 %v2017, %v2015
        %v2019 = vxor.u32 %v2018, 2147483648
        %v2020 = vsel %vm1937, %v2019, %v2018
        %v2021 = vsub.s32 4, %v1997
        %v2022 = vsel %vm1937, %v2021, %v1997
        %v2023 = vsel %vm1936, %v1933, %v2020
        %v2024 = vsel %vm1936, 0, %v2022
        %v2025 = vcosq.f32.pop %v2023
        %v2026 = vsinq.f32.pop %v2023
        %vm2027 = vweird.f32 %v1933
        %v2028 = vadd.s32 %v2024, 3
        %v2029 = vand.u32 %v2028, 3
        %vm2030 = vcmp.lt.s32.totalorder %v2029, 2
        %vm2031 = vcmp.eq.s32.totalorder %v2029, 0
        %v2032 = vxor.u32 %v2026, 2147483648
        %v2033 = vsel %vm2031, %v2025, %v2032
        %vm2034 = vcmp.eq.s32.totalorder %v2029, 2
        %v2035 = vxor.u32 %v2025, 2147483648
        %v2036 = vsel %vm2034, %v2035, %v2026
        %v2037 = vsel %vm2030, %v2033, %v2036
        %v2038 = vsel %vm2027, nan, %v2037
        %v2039 = vand.u32 2147483647, %v1934
        %vm2040 = vcmp.le.f32.partialorder %v2039, 0.7853982
        %vm2041 = vcmp.lt.s32.totalorder %v1934, 0
        %v2042 = vand.u32 %v1934, 2139095040
        %v2043 = vshrl.u32 %v2042, 23
        %v2044 = vsub.s32 %v2043, 127
        %v2045 = vand.u32 2147483647, %v1934
        %v2046 = vand.u32 %v2045, 8388607
        %v2047 = vor.u32 %v2046, 8388608
        %v2048 = vsub.s32 0, %v2047
        %v2049 = vadd.s32 %v2044, 1
        %vm2050 = vcmp.gt.s32.totalorder %v2049, 0
        %v2051 = vsel %vm2050, %v2049, 0
        %v2052 = vshrl.u32 %v2051, 5
        %v2053 = vand.u32 %v2051, 31
        %v2054 = vsub.s32 32, %v2053
        %v2055 = vshrl.u32 683565275, %v2054
        %v2056 = vshll.u32 683565275, %v2053
        %v2057 = vshrl.u32 2475754826, %v2054
        %v2058 = vor.u32 %v2056, %v2057
        %v2059 = vshll.u32 2475754826, %v2053
        %v2060 = vshrl.u32 2131351028, %v2054
        %v2061 = vor.u32 %v2059, %v2060
        %v2062 = vshll.u32 2131351028, %v2053
        %v2063 = vshrl.u32 2102212464, %v2054
        %v2064 = vor.u32 %v2062, %v2063
        %v2065 = vshll.u32 2102212464, %v2053
        %v2066 = vshrl.u32 920167782, %v2054
        %v2067 = vor.u32 %v2065, %v2066
        %v2068 = vshll.u32 920167782, %v2053
        %v2069 = vshrl.u32 1326507024, %v2054
        %v2070 = vor.u32 %v2068, %v2069
        %vm2071 = vcmp.lt.s32.totalorder %v2052, 1
        %vm2072 = vcmp.lt.s32.totalorder %v2052, 2
        %vm2073 = vcmp.lt.s32.totalorder %v2052, 3
        %vm2074 = vcmp.lt.s32.totalorder %v2052, 4
        %v2075 = vsel %vm2071, %v2055, %v2058
        %v2076 = vsel %vm2074, %v2064, 2102212464
        %v2077 = vsel %vm2073, %v2061, %v2076
        %v2078 = vsel %vm2072, %v2075, %v2077
        %v2079 = vsel %vm2071, %v2058, %v2061
        %v2080 = vsel %vm2074, %v2067, 920167782
        %v2081 = vsel %vm2073, %v2064, %v2080
        %v2082 = vsel %vm2072, %v2079, %v2081
        %v2083 = vsel %vm2071, %v2061, %v2064
        %v2084 = vsel %vm2074, %v2070, 1326507024
        %v2085 = vsel %vm2073, %v2067, %v2084
        %v2086 = vsel %vm2072, %v2083, %v2085
        %v2087 = vshll.u32 %v2047, 8
        %v2088 = vmul.u32.u64.compose %v2087, %v2086
        %v2089 = vextract.low.u32 %v2088
        %v2090 = vextract.high.u32 %v2088
        %v2091 = vmul.u32.u64.compose %v2087, %v2082
        %v2092 = vextract.low.u32 %v2091
        %v2093 = vextract.high.u32 %v2091
        %v2094 = vmul.u32 %v2087, %v2078
        %v2095 = vadd.s32 %v2090, %v2092
        %vm2096 = vc.u32 %v2090, %v2092
        %v2097 = vadd.s32 %v2093, 1
        %v2098 = vsel %vm2096, %v2097, %v2093
        %v2099 = vadd.s32 %v2094, %v2098
        %v2100 = vadd.s32 %v2099, 536870912
        %v2101 = vshrl.u32 %v2100, 30
        %v2102 = vshll.u32 %v2101, 30
        %v2103 = vsub.s32 %v2099, %v2102
        %vm2104 = vcmp.lt.s32.totalorder %v2103, 0
        %v2105 = vsub.s32 0, %v2103
        %v2106 = vsel %vm2104, %v2105, %v2103
        %v2107 = vclz %v2106
        %v2108 = vsub.s32 %v2107, 2
        %vm2109 = vcmp.gt.s32.totalorder 0, %v2108
        %v2110 = vsel %vm2109, 0, %v2108
        %v2111 = vsub.s32 32, %v2110
        %v2112 = vshll.u32 %v2103, %v2110
        %v2113 = vshrl.u32 %v2095, %v2111
        %v2114 = vor.u32 %v2112, %v2113
        %v2115 = vsub.s32 4294967266, %v2110
        %v2116 = vadd.s32 %v2115, 127
        %v2117 = vshll.u32 %v2116, 23
        %v2118 = vor.u32 4788187, %v2117
        %v2119 = vand.u32 2147483647, %v2118
        %v2121 = vcvt.s32.f32 %v2114
        %v2122 = vmul.f32 %v2121, %v2119
        %v2123 = vxor.u32 %v2122, 2147483648
        %v2124 = vsel %vm2041, %v2123, %v2122
        %v2125 = vsub.s32 4, %v2101
        %v2126 = vsel %vm2041, %v2125, %v2101
        %v2127 = vsel %vm2040, %v1934, %v2124
        %v2128 = vsel %vm2040, 0, %v2126
        %v2129 = vcosq.f32.pop %v2127
        %v2130 = vsinq.f32.pop %v2127
        %vm2131 = vweird.f32 %v1934
        %v2132 = vadd.s32 %v2128, 3
        %v2133 = vand.u32 %v2132, 3
        %vm2134 = vcmp.lt.s32.totalorder %v2133, 2
        %vm2135 = vcmp.eq.s32.totalorder %v2133, 0
        %v2136 = vxor.u32 %v2130, 2147483648
        %v2137 = vsel %vm2135, %v2129, %v2136
        %vm2138 = vcmp.eq.s32.totalorder %v2133, 2
        %v2139 = vxor.u32 %v2129, 2147483648
        %v2140 = vsel %vm2138, %v2139, %v2130
        %v2141 = vsel %vm2134, %v2137, %v2140
        %v2142 = vsel %vm2131, nan, %v2141
        %v2145 = vcombine.high %v2038, %v2038
        %v2146 = vcombine.high %v2142, %v2142
        %v2147 = vrot.slane %v2038, 5
        %v2148 = vrot.slane %v2145, 5
        %v2149 = vrot.slane %v2142, 5
        %v2150 = vrot.slane %v2146, 5
        %2155 = vst [vmem:[%s132 + $0x60] sm:$0x38] %v2147
        %2156 = vst [vmem:[%s132 + $0x68] sm:$0x38] %v2148
        %2157 = vst [vmem:[%s132 + $0x70] sm:$0x38] %v2149
        %2158 = vst [vmem:[%s132 + $0x78] sm:$0x38] %v2150
        %v2159 = vand.u32 2147483647, %v1933
        %vm2160 = vcmp.le.f32.partialorder %v2159, 0.7853982
        %vm2161 = vcmp.lt.s32.totalorder %v1933, 0
        %v2162 = vand.u32 %v1933, 2139095040
        %v2163 = vshrl.u32 %v2162, 23
        %v2164 = vsub.s32 %v2163, 127
        %v2165 = vand.u32 2147483647, %v1933
        %v2166 = vand.u32 %v2165, 8388607
        %v2167 = vor.u32 %v2166, 8388608
        %v2168 = vsub.s32 0, %v2167
        %v2169 = vadd.s32 %v2164, 1
        %vm2170 = vcmp.gt.s32.totalorder %v2169, 0
        %v2171 = vsel %vm2170, %v2169, 0
        %v2172 = vshrl.u32 %v2171, 5
        %v2173 = vand.u32 %v2171, 31
        %v2174 = vsub.s32 32, %v2173
        %v2175 = vshrl.u32 683565275, %v2174
        %v2176 = vshll.u32 683565275, %v2173
        %v2177 = vshrl.u32 2475754826, %v2174
        %v2178 = vor.u32 %v2176, %v2177
        %v2179 = vshll.u32 2475754826, %v2173
        %v2180 = vshrl.u32 2131351028, %v2174
        %v2181 = vor.u32 %v2179, %v2180
        %v2182 = vshll.u32 2131351028, %v2173
        %v2183 = vshrl.u32 2102212464, %v2174
        %v2184 = vor.u32 %v2182, %v2183
        %v2185 = vshll.u32 2102212464, %v2173
        %v2186 = vshrl.u32 920167782, %v2174
        %v2187 = vor.u32 %v2185, %v2186
        %v2188 = vshll.u32 920167782, %v2173
        %v2189 = vshrl.u32 1326507024, %v2174
        %v2190 = vor.u32 %v2188, %v2189
        %vm2191 = vcmp.lt.s32.totalorder %v2172, 1
        %vm2192 = vcmp.lt.s32.totalorder %v2172, 2
        %vm2193 = vcmp.lt.s32.totalorder %v2172, 3
        %vm2194 = vcmp.lt.s32.totalorder %v2172, 4
        %v2195 = vsel %vm2191, %v2175, %v2178
        %v2196 = vsel %vm2194, %v2184, 2102212464
        %v2197 = vsel %vm2193, %v2181, %v2196
        %v2198 = vsel %vm2192, %v2195, %v2197
        %v2199 = vsel %vm2191, %v2178, %v2181
        %v2200 = vsel %vm2194, %v2187, 920167782
        %v2201 = vsel %vm2193, %v2184, %v2200
        %v2202 = vsel %vm2192, %v2199, %v2201
        %v2203 = vsel %vm2191, %v2181, %v2184
        %v2204 = vsel %vm2194, %v2190, 1326507024
        %v2205 = vsel %vm2193, %v2187, %v2204
        %v2206 = vsel %vm2192, %v2203, %v2205
        %v2207 = vshll.u32 %v2167, 8
        %v2208 = vmul.u32.u64.compose %v2207, %v2206
        %v2209 = vextract.low.u32 %v2208
        %v2210 = vextract.high.u32 %v2208
        %v2211 = vmul.u32.u64.compose %v2207, %v2202
        %v2212 = vextract.low.u32 %v2211
        %v2213 = vextract.high.u32 %v2211
        %v2214 = vmul.u32 %v2207, %v2198
        %v2215 = vadd.s32 %v2210, %v2212
        %vm2216 = vc.u32 %v2210, %v2212
        %v2217 = vadd.s32 %v2213, 1
        %v2218 = vsel %vm2216, %v2217, %v2213
        %v2219 = vadd.s32 %v2214, %v2218
        %v2220 = vadd.s32 %v2219, 536870912
        %v2221 = vshrl.u32 %v2220, 30
        %v2222 = vshll.u32 %v2221, 30
        %v2223 = vsub.s32 %v2219, %v2222
        %vm2224 = vcmp.lt.s32.totalorder %v2223, 0
        %v2225 = vsub.s32 0, %v2223
        %v2226 = vsel %vm2224, %v2225, %v2223
        %v2227 = vclz %v2226
        %v2228 = vsub.s32 %v2227, 2
        %vm2229 = vcmp.gt.s32.totalorder 0, %v2228
        %v2230 = vsel %vm2229, 0, %v2228
        %v2231 = vsub.s32 32, %v2230
        %v2232 = vshll.u32 %v2223, %v2230
        %v2233 = vshrl.u32 %v2215, %v2231
        %v2234 = vor.u32 %v2232, %v2233
        %v2235 = vsub.s32 4294967266, %v2230
        %v2236 = vadd.s32 %v2235, 127
        %v2237 = vshll.u32 %v2236, 23
        %v2238 = vor.u32 4788187, %v2237
        %v2239 = vand.u32 2147483647, %v2238
        %v2241 = vcvt.s32.f32 %v2234
        %v2242 = vmul.f32 %v2241, %v2239
        %v2243 = vxor.u32 %v2242, 2147483648
        %v2244 = vsel %vm2161, %v2243, %v2242
        %v2245 = vsub.s32 4, %v2221
        %v2246 = vsel %vm2161, %v2245, %v2221
        %v2247 = vsel %vm2160, %v1933, %v2244
        %v2248 = vsel %vm2160, 0, %v2246
        %v2249 = vcosq.f32.pop %v2247
        %v2250 = vsinq.f32.pop %v2247
        %vm2251 = vweird.f32 %v1933
        %v2252 = vand.u32 %v2248, 3
        %vm2253 = vcmp.lt.s32.totalorder %v2252, 2
        %vm2254 = vcmp.eq.s32.totalorder %v2252, 0
        %v2255 = vxor.u32 %v2250, 2147483648
        %v2256 = vsel %vm2254, %v2249, %v2255
        %vm2257 = vcmp.eq.s32.totalorder %v2252, 2
        %v2258 = vxor.u32 %v2249, 2147483648
        %v2259 = vsel %vm2257, %v2258, %v2250
        %v2260 = vsel %vm2253, %v2256, %v2259
        %v2261 = vsel %vm2251, nan, %v2260
        %v2262 = vand.u32 2147483647, %v1934
        %vm2263 = vcmp.le.f32.partialorder %v2262, 0.7853982
        %vm2264 = vcmp.lt.s32.totalorder %v1934, 0
        %v2265 = vand.u32 %v1934, 2139095040
        %v2266 = vshrl.u32 %v2265, 23
        %v2267 = vsub.s32 %v2266, 127
        %v2268 = vand.u32 2147483647, %v1934
        %v2269 = vand.u32 %v2268, 8388607
        %v2270 = vor.u32 %v2269, 8388608
        %v2271 = vsub.s32 0, %v2270
        %v2272 = vadd.s32 %v2267, 1
        %vm2273 = vcmp.gt.s32.totalorder %v2272, 0
        %v2274 = vsel %vm2273, %v2272, 0
        %v2275 = vshrl.u32 %v2274, 5
        %v2276 = vand.u32 %v2274, 31
        %v2277 = vsub.s32 32, %v2276
        %v2278 = vshrl.u32 683565275, %v2277
        %v2279 = vshll.u32 683565275, %v2276
        %v2280 = vshrl.u32 2475754826, %v2277
        %v2281 = vor.u32 %v2279, %v2280
        %v2282 = vshll.u32 2475754826, %v2276
        %v2283 = vshrl.u32 2131351028, %v2277
        %v2284 = vor.u32 %v2282, %v2283
        %v2285 = vshll.u32 2131351028, %v2276
        %v2286 = vshrl.u32 2102212464, %v2277
        %v2287 = vor.u32 %v2285, %v2286
        %v2288 = vshll.u32 2102212464, %v2276
        %v2289 = vshrl.u32 920167782, %v2277
        %v2290 = vor.u32 %v2288, %v2289
        %v2291 = vshll.u32 920167782, %v2276
        %v2292 = vshrl.u32 1326507024, %v2277
        %v2293 = vor.u32 %v2291, %v2292
        %vm2294 = vcmp.lt.s32.totalorder %v2275, 1
        %vm2295 = vcmp.lt.s32.totalorder %v2275, 2
        %vm2296 = vcmp.lt.s32.totalorder %v2275, 3
        %vm2297 = vcmp.lt.s32.totalorder %v2275, 4
        %v2298 = vsel %vm2294, %v2278, %v2281
        %v2299 = vsel %vm2297, %v2287, 2102212464
        %v2300 = vsel %vm2296, %v2284, %v2299
        %v2301 = vsel %vm2295, %v2298, %v2300
        %v2302 = vsel %vm2294, %v2281, %v2284
        %v2303 = vsel %vm2297, %v2290, 920167782
        %v2304 = vsel %vm2296, %v2287, %v2303
        %v2305 = vsel %vm2295, %v2302, %v2304
        %v2306 = vsel %vm2294, %v2284, %v2287
        %v2307 = vsel %vm2297, %v2293, 1326507024
        %v2308 = vsel %vm2296, %v2290, %v2307
        %v2309 = vsel %vm2295, %v2306, %v2308
        %v2310 = vshll.u32 %v2270, 8
        %v2311 = vmul.u32.u64.compose %v2310, %v2309
        %v2312 = vextract.low.u32 %v2311
        %v2313 = vextract.high.u32 %v2311
        %v2314 = vmul.u32.u64.compose %v2310, %v2305
        %v2315 = vextract.low.u32 %v2314
        %v2316 = vextract.high.u32 %v2314
        %v2317 = vmul.u32 %v2310, %v2301
        %v2318 = vadd.s32 %v2313, %v2315
        %vm2319 = vc.u32 %v2313, %v2315
        %v2320 = vadd.s32 %v2316, 1
        %v2321 = vsel %vm2319, %v2320, %v2316
        %v2322 = vadd.s32 %v2317, %v2321
        %v2323 = vadd.s32 %v2322, 536870912
        %v2324 = vshrl.u32 %v2323, 30
        %v2325 = vshll.u32 %v2324, 30
        %v2326 = vsub.s32 %v2322, %v2325
        %vm2327 = vcmp.lt.s32.totalorder %v2326, 0
        %v2328 = vsub.s32 0, %v2326
        %v2329 = vsel %vm2327, %v2328, %v2326
        %v2330 = vclz %v2329
        %v2331 = vsub.s32 %v2330, 2
        %vm2332 = vcmp.gt.s32.totalorder 0, %v2331
        %v2333 = vsel %vm2332, 0, %v2331
        %v2334 = vsub.s32 32, %v2333
        %v2335 = vshll.u32 %v2326, %v2333
        %v2336 = vshrl.u32 %v2318, %v2334
        %v2337 = vor.u32 %v2335, %v2336
        %v2338 = vsub.s32 4294967266, %v2333
        %v2339 = vadd.s32 %v2338, 127
        %v2340 = vshll.u32 %v2339, 23
        %v2341 = vor.u32 4788187, %v2340
        %v2342 = vand.u32 2147483647, %v2341
        %v2344 = vcvt.s32.f32 %v2337
        %v2345 = vmul.f32 %v2344, %v2342
        %v2346 = vxor.u32 %v2345, 2147483648
        %v2347 = vsel %vm2264, %v2346, %v2345
        %v2348 = vsub.s32 4, %v2324
        %v2349 = vsel %vm2264, %v2348, %v2324
        %v2350 = vsel %vm2263, %v1934, %v2347
        %v2351 = vsel %vm2263, 0, %v2349
        %v2352 = vcosq.f32.pop %v2350
        %v2353 = vsinq.f32.pop %v2350
        %vm2354 = vweird.f32 %v1934
        %v2355 = vand.u32 %v2351, 3
        %vm2356 = vcmp.lt.s32.totalorder %v2355, 2
        %vm2357 = vcmp.eq.s32.totalorder %v2355, 0
        %v2358 = vxor.u32 %v2353, 2147483648
        %v2359 = vsel %vm2357, %v2352, %v2358
        %vm2360 = vcmp.eq.s32.totalorder %v2355, 2
        %v2361 = vxor.u32 %v2352, 2147483648
        %v2362 = vsel %vm2360, %v2361, %v2353
        %v2363 = vsel %vm2356, %v2359, %v2362
        %v2364 = vsel %vm2354, nan, %v2363
        %v2367 = vcombine.high %v2261, %v2261
        %v2368 = vcombine.high %v2364, %v2364
        %v2369 = vrot.slane %v2261, 2
        %v2370 = vrot.slane %v2367, 2
        %v2371 = vrot.slane %v2364, 2
        %v2372 = vrot.slane %v2368, 2
        %2377 = vst [vmem:[%s132 + $0x60] sm:$0xc0] %v2369
        %2378 = vst [vmem:[%s132 + $0x68] sm:$0xc0] %v2370
        %2379 = vst [vmem:[%s132 + $0x70] sm:$0xc0] %v2371
        %2380 = vst [vmem:[%s132 + $0x78] sm:$0xc0] %v2372
        %2381 = vst [vmem:[%s132 + $0x80] sm:$0x1] %v2369
        %2382 = vst [vmem:[%s132 + $0x88] sm:$0x1] %v2370
        %2383 = vst [vmem:[%s132 + $0x90] sm:$0x1] %v2371
        %2384 = vst [vmem:[%s132 + $0x98] sm:$0x1] %v2372
        %v2385 = vmul.f32 %v135, 32.0
        %v2386 = vmul.f32 %v136, 32.0
        %v2387 = vand.u32 2147483647, %v2385
        %vm2388 = vcmp.le.f32.partialorder %v2387, 0.7853982
        %vm2389 = vcmp.lt.s32.totalorder %v2385, 0
        %v2390 = vand.u32 %v2385, 2139095040
        %v2391 = vshrl.u32 %v2390, 23
        %v2392 = vsub.s32 %v2391, 127
        %v2393 = vand.u32 2147483647, %v2385
        %v2394 = vand.u32 %v2393, 8388607
        %v2395 = vor.u32 %v2394, 8388608
        %v2396 = vsub.s32 0, %v2395
        %v2397 = vadd.s32 %v2392, 1
        %vm2398 = vcmp.gt.s32.totalorder %v2397, 0
        %v2399 = vsel %vm2398, %v2397, 0
        %v2400 = vshrl.u32 %v2399, 5
        %v2401 = vand.u32 %v2399, 31
        %v2402 = vsub.s32 32, %v2401
        %v2403 = vshrl.u32 683565275, %v2402
        %v2404 = vshll.u32 683565275, %v2401
        %v2405 = vshrl.u32 2475754826, %v2402
        %v2406 = vor.u32 %v2404, %v2405
        %v2407 = vshll.u32 2475754826, %v2401
        %v2408 = vshrl.u32 2131351028, %v2402
        %v2409 = vor.u32 %v2407, %v2408
        %v2410 = vshll.u32 2131351028, %v2401
        %v2411 = vshrl.u32 2102212464, %v2402
        %v2412 = vor.u32 %v2410, %v2411
        %v2413 = vshll.u32 2102212464, %v2401
        %v2414 = vshrl.u32 920167782, %v2402
        %v2415 = vor.u32 %v2413, %v2414
        %v2416 = vshll.u32 920167782, %v2401
        %v2417 = vshrl.u32 1326507024, %v2402
        %v2418 = vor.u32 %v2416, %v2417
        %vm2419 = vcmp.lt.s32.totalorder %v2400, 1
        %vm2420 = vcmp.lt.s32.totalorder %v2400, 2
        %vm2421 = vcmp.lt.s32.totalorder %v2400, 3
        %vm2422 = vcmp.lt.s32.totalorder %v2400, 4
        %v2423 = vsel %vm2419, %v2403, %v2406
        %v2424 = vsel %vm2422, %v2412, 2102212464
        %v2425 = vsel %vm2421, %v2409, %v2424
        %v2426 = vsel %vm2420, %v2423, %v2425
        %v2427 = vsel %vm2419, %v2406, %v2409
        %v2428 = vsel %vm2422, %v2415, 920167782
        %v2429 = vsel %vm2421, %v2412, %v2428
        %v2430 = vsel %vm2420, %v2427, %v2429
        %v2431 = vsel %vm2419, %v2409, %v2412
        %v2432 = vsel %vm2422, %v2418, 1326507024
        %v2433 = vsel %vm2421, %v2415, %v2432
        %v2434 = vsel %vm2420, %v2431, %v2433
        %v2435 = vshll.u32 %v2395, 8
        %v2436 = vmul.u32.u64.compose %v2435, %v2434
        %v2437 = vextract.low.u32 %v2436
        %v2438 = vextract.high.u32 %v2436
        %v2439 = vmul.u32.u64.compose %v2435, %v2430
        %v2440 = vextract.low.u32 %v2439
        %v2441 = vextract.high.u32 %v2439
        %v2442 = vmul.u32 %v2435, %v2426
        %v2443 = vadd.s32 %v2438, %v2440
        %vm2444 = vc.u32 %v2438, %v2440
        %v2445 = vadd.s32 %v2441, 1
        %v2446 = vsel %vm2444, %v2445, %v2441
        %v2447 = vadd.s32 %v2442, %v2446
        %v2448 = vadd.s32 %v2447, 536870912
        %v2449 = vshrl.u32 %v2448, 30
        %v2450 = vshll.u32 %v2449, 30
        %v2451 = vsub.s32 %v2447, %v2450
        %vm2452 = vcmp.lt.s32.totalorder %v2451, 0
        %v2453 = vsub.s32 0, %v2451
        %v2454 = vsel %vm2452, %v2453, %v2451
        %v2455 = vclz %v2454
        %v2456 = vsub.s32 %v2455, 2
        %vm2457 = vcmp.gt.s32.totalorder 0, %v2456
        %v2458 = vsel %vm2457, 0, %v2456
        %v2459 = vsub.s32 32, %v2458
        %v2460 = vshll.u32 %v2451, %v2458
        %v2461 = vshrl.u32 %v2443, %v2459
        %v2462 = vor.u32 %v2460, %v2461
        %v2463 = vsub.s32 4294967266, %v2458
        %v2464 = vadd.s32 %v2463, 127
        %v2465 = vshll.u32 %v2464, 23
        %v2466 = vor.u32 4788187, %v2465
        %v2467 = vand.u32 2147483647, %v2466
        %v2469 = vcvt.s32.f32 %v2462
        %v2470 = vmul.f32 %v2469, %v2467
        %v2471 = vxor.u32 %v2470, 2147483648
        %v2472 = vsel %vm2389, %v2471, %v2470
        %v2473 = vsub.s32 4, %v2449
        %v2474 = vsel %vm2389, %v2473, %v2449
        %v2475 = vsel %vm2388, %v2385, %v2472
        %v2476 = vsel %vm2388, 0, %v2474
        %v2477 = vcosq.f32.pop %v2475
        %v2478 = vsinq.f32.pop %v2475
        %vm2479 = vweird.f32 %v2385
        %v2480 = vadd.s32 %v2476, 3
        %v2481 = vand.u32 %v2480, 3
        %vm2482 = vcmp.lt.s32.totalorder %v2481, 2
        %vm2483 = vcmp.eq.s32.totalorder %v2481, 0
        %v2484 = vxor.u32 %v2478, 2147483648
        %v2485 = vsel %vm2483, %v2477, %v2484
        %vm2486 = vcmp.eq.s32.totalorder %v2481, 2
        %v2487 = vxor.u32 %v2477, 2147483648
        %v2488 = vsel %vm2486, %v2487, %v2478
        %v2489 = vsel %vm2482, %v2485, %v2488
        %v2490 = vsel %vm2479, nan, %v2489
        %v2491 = vand.u32 2147483647, %v2386
        %vm2492 = vcmp.le.f32.partialorder %v2491, 0.7853982
        %vm2493 = vcmp.lt.s32.totalorder %v2386, 0
        %v2494 = vand.u32 %v2386, 2139095040
        %v2495 = vshrl.u32 %v2494, 23
        %v2496 = vsub.s32 %v2495, 127
        %v2497 = vand.u32 2147483647, %v2386
        %v2498 = vand.u32 %v2497, 8388607
        %v2499 = vor.u32 %v2498, 8388608
        %v2500 = vsub.s32 0, %v2499
        %v2501 = vadd.s32 %v2496, 1
        %vm2502 = vcmp.gt.s32.totalorder %v2501, 0
        %v2503 = vsel %vm2502, %v2501, 0
        %v2504 = vshrl.u32 %v2503, 5
        %v2505 = vand.u32 %v2503, 31
        %v2506 = vsub.s32 32, %v2505
        %v2507 = vshrl.u32 683565275, %v2506
        %v2508 = vshll.u32 683565275, %v2505
        %v2509 = vshrl.u32 2475754826, %v2506
        %v2510 = vor.u32 %v2508, %v2509
        %v2511 = vshll.u32 2475754826, %v2505
        %v2512 = vshrl.u32 2131351028, %v2506
        %v2513 = vor.u32 %v2511, %v2512
        %v2514 = vshll.u32 2131351028, %v2505
        %v2515 = vshrl.u32 2102212464, %v2506
        %v2516 = vor.u32 %v2514, %v2515
        %v2517 = vshll.u32 2102212464, %v2505
        %v2518 = vshrl.u32 920167782, %v2506
        %v2519 = vor.u32 %v2517, %v2518
        %v2520 = vshll.u32 920167782, %v2505
        %v2521 = vshrl.u32 1326507024, %v2506
        %v2522 = vor.u32 %v2520, %v2521
        %vm2523 = vcmp.lt.s32.totalorder %v2504, 1
        %vm2524 = vcmp.lt.s32.totalorder %v2504, 2
        %vm2525 = vcmp.lt.s32.totalorder %v2504, 3
        %vm2526 = vcmp.lt.s32.totalorder %v2504, 4
        %v2527 = vsel %vm2523, %v2507, %v2510
        %v2528 = vsel %vm2526, %v2516, 2102212464
        %v2529 = vsel %vm2525, %v2513, %v2528
        %v2530 = vsel %vm2524, %v2527, %v2529
        %v2531 = vsel %vm2523, %v2510, %v2513
        %v2532 = vsel %vm2526, %v2519, 920167782
        %v2533 = vsel %vm2525, %v2516, %v2532
        %v2534 = vsel %vm2524, %v2531, %v2533
        %v2535 = vsel %vm2523, %v2513, %v2516
        %v2536 = vsel %vm2526, %v2522, 1326507024
        %v2537 = vsel %vm2525, %v2519, %v2536
        %v2538 = vsel %vm2524, %v2535, %v2537
        %v2539 = vshll.u32 %v2499, 8
        %v2540 = vmul.u32.u64.compose %v2539, %v2538
        %v2541 = vextract.low.u32 %v2540
        %v2542 = vextract.high.u32 %v2540
        %v2543 = vmul.u32.u64.compose %v2539, %v2534
        %v2544 = vextract.low.u32 %v2543
        %v2545 = vextract.high.u32 %v2543
        %v2546 = vmul.u32 %v2539, %v2530
        %v2547 = vadd.s32 %v2542, %v2544
        %vm2548 = vc.u32 %v2542, %v2544
        %v2549 = vadd.s32 %v2545, 1
        %v2550 = vsel %vm2548, %v2549, %v2545
        %v2551 = vadd.s32 %v2546, %v2550
        %v2552 = vadd.s32 %v2551, 536870912
        %v2553 = vshrl.u32 %v2552, 30
        %v2554 = vshll.u32 %v2553, 30
        %v2555 = vsub.s32 %v2551, %v2554
        %vm2556 = vcmp.lt.s32.totalorder %v2555, 0
        %v2557 = vsub.s32 0, %v2555
        %v2558 = vsel %vm2556, %v2557, %v2555
        %v2559 = vclz %v2558
        %v2560 = vsub.s32 %v2559, 2
        %vm2561 = vcmp.gt.s32.totalorder 0, %v2560
        %v2562 = vsel %vm2561, 0, %v2560
        %v2563 = vsub.s32 32, %v2562
        %v2564 = vshll.u32 %v2555, %v2562
        %v2565 = vshrl.u32 %v2547, %v2563
        %v2566 = vor.u32 %v2564, %v2565
        %v2567 = vsub.s32 4294967266, %v2562
        %v2568 = vadd.s32 %v2567, 127
        %v2569 = vshll.u32 %v2568, 23
        %v2570 = vor.u32 4788187, %v2569
        %v2571 = vand.u32 2147483647, %v2570
        %v2573 = vcvt.s32.f32 %v2566
        %v2574 = vmul.f32 %v2573, %v2571
        %v2575 = vxor.u32 %v2574, 2147483648
        %v2576 = vsel %vm2493, %v2575, %v2574
        %v2577 = vsub.s32 4, %v2553
        %v2578 = vsel %vm2493, %v2577, %v2553
        %v2579 = vsel %vm2492, %v2386, %v2576
        %v2580 = vsel %vm2492, 0, %v2578
        %v2581 = vcosq.f32.pop %v2579
        %v2582 = vsinq.f32.pop %v2579
        %vm2583 = vweird.f32 %v2386
        %v2584 = vadd.s32 %v2580, 3
        %v2585 = vand.u32 %v2584, 3
        %vm2586 = vcmp.lt.s32.totalorder %v2585, 2
        %vm2587 = vcmp.eq.s32.totalorder %v2585, 0
        %v2588 = vxor.u32 %v2582, 2147483648
        %v2589 = vsel %vm2587, %v2581, %v2588
        %vm2590 = vcmp.eq.s32.totalorder %v2585, 2
        %v2591 = vxor.u32 %v2581, 2147483648
        %v2592 = vsel %vm2590, %v2591, %v2582
        %v2593 = vsel %vm2586, %v2589, %v2592
        %v2594 = vsel %vm2583, nan, %v2593
        %v2597 = vcombine.high %v2490, %v2490
        %v2598 = vcombine.high %v2594, %v2594
        %v2599 = vrot.slane %v2490, 7
        %v2600 = vrot.slane %v2597, 7
        %v2601 = vrot.slane %v2594, 7
        %v2602 = vrot.slane %v2598, 7
        %2607 = vst [vmem:[%s132 + $0x80] sm:$0xe] %v2599
        %2608 = vst [vmem:[%s132 + $0x88] sm:$0xe] %v2600
        %2609 = vst [vmem:[%s132 + $0x90] sm:$0xe] %v2601
        %2610 = vst [vmem:[%s132 + $0x98] sm:$0xe] %v2602
        %v2611 = vand.u32 2147483647, %v2385
        %vm2612 = vcmp.le.f32.partialorder %v2611, 0.7853982
        %vm2613 = vcmp.lt.s32.totalorder %v2385, 0
        %v2614 = vand.u32 %v2385, 2139095040
        %v2615 = vshrl.u32 %v2614, 23
        %v2616 = vsub.s32 %v2615, 127
        %v2617 = vand.u32 2147483647, %v2385
        %v2618 = vand.u32 %v2617, 8388607
        %v2619 = vor.u32 %v2618, 8388608
        %v2620 = vsub.s32 0, %v2619
        %v2621 = vadd.s32 %v2616, 1
        %vm2622 = vcmp.gt.s32.totalorder %v2621, 0
        %v2623 = vsel %vm2622, %v2621, 0
        %v2624 = vshrl.u32 %v2623, 5
        %v2625 = vand.u32 %v2623, 31
        %v2626 = vsub.s32 32, %v2625
        %v2627 = vshrl.u32 683565275, %v2626
        %v2628 = vshll.u32 683565275, %v2625
        %v2629 = vshrl.u32 2475754826, %v2626
        %v2630 = vor.u32 %v2628, %v2629
        %v2631 = vshll.u32 2475754826, %v2625
        %v2632 = vshrl.u32 2131351028, %v2626
        %v2633 = vor.u32 %v2631, %v2632
        %v2634 = vshll.u32 2131351028, %v2625
        %v2635 = vshrl.u32 2102212464, %v2626
        %v2636 = vor.u32 %v2634, %v2635
        %v2637 = vshll.u32 2102212464, %v2625
        %v2638 = vshrl.u32 920167782, %v2626
        %v2639 = vor.u32 %v2637, %v2638
        %v2640 = vshll.u32 920167782, %v2625
        %v2641 = vshrl.u32 1326507024, %v2626
        %v2642 = vor.u32 %v2640, %v2641
        %vm2643 = vcmp.lt.s32.totalorder %v2624, 1
        %vm2644 = vcmp.lt.s32.totalorder %v2624, 2
        %vm2645 = vcmp.lt.s32.totalorder %v2624, 3
        %vm2646 = vcmp.lt.s32.totalorder %v2624, 4
        %v2647 = vsel %vm2643, %v2627, %v2630
        %v2648 = vsel %vm2646, %v2636, 2102212464
        %v2649 = vsel %vm2645, %v2633, %v2648
        %v2650 = vsel %vm2644, %v2647, %v2649
        %v2651 = vsel %vm2643, %v2630, %v2633
        %v2652 = vsel %vm2646, %v2639, 920167782
        %v2653 = vsel %vm2645, %v2636, %v2652
        %v2654 = vsel %vm2644, %v2651, %v2653
        %v2655 = vsel %vm2643, %v2633, %v2636
        %v2656 = vsel %vm2646, %v2642, 1326507024
        %v2657 = vsel %vm2645, %v2639, %v2656
        %v2658 = vsel %vm2644, %v2655, %v2657
        %v2659 = vshll.u32 %v2619, 8
        %v2660 = vmul.u32.u64.compose %v2659, %v2658
        %v2661 = vextract.low.u32 %v2660
        %v2662 = vextract.high.u32 %v2660
        %v2663 = vmul.u32.u64.compose %v2659, %v2654
        %v2664 = vextract.low.u32 %v2663
        %v2665 = vextract.high.u32 %v2663
        %v2666 = vmul.u32 %v2659, %v2650
        %v2667 = vadd.s32 %v2662, %v2664
        %vm2668 = vc.u32 %v2662, %v2664
        %v2669 = vadd.s32 %v2665, 1
        %v2670 = vsel %vm2668, %v2669, %v2665
        %v2671 = vadd.s32 %v2666, %v2670
        %v2672 = vadd.s32 %v2671, 536870912
        %v2673 = vshrl.u32 %v2672, 30
        %v2674 = vshll.u32 %v2673, 30
        %v2675 = vsub.s32 %v2671, %v2674
        %vm2676 = vcmp.lt.s32.totalorder %v2675, 0
        %v2677 = vsub.s32 0, %v2675
        %v2678 = vsel %vm2676, %v2677, %v2675
        %v2679 = vclz %v2678
        %v2680 = vsub.s32 %v2679, 2
        %vm2681 = vcmp.gt.s32.totalorder 0, %v2680
        %v2682 = vsel %vm2681, 0, %v2680
        %v2683 = vsub.s32 32, %v2682
        %v2684 = vshll.u32 %v2675, %v2682
        %v2685 = vshrl.u32 %v2667, %v2683
        %v2686 = vor.u32 %v2684, %v2685
        %v2687 = vsub.s32 4294967266, %v2682
        %v2688 = vadd.s32 %v2687, 127
        %v2689 = vshll.u32 %v2688, 23
        %v2690 = vor.u32 4788187, %v2689
        %v2691 = vand.u32 2147483647, %v2690
        %v2693 = vcvt.s32.f32 %v2686
        %v2694 = vmul.f32 %v2693, %v2691
        %v2695 = vxor.u32 %v2694, 2147483648
        %v2696 = vsel %vm2613, %v2695, %v2694
        %v2697 = vsub.s32 4, %v2673
        %v2698 = vsel %vm2613, %v2697, %v2673
        %v2699 = vsel %vm2612, %v2385, %v2696
        %v2700 = vsel %vm2612, 0, %v2698
        %v2701 = vcosq.f32.pop %v2699
        %v2702 = vsinq.f32.pop %v2699
        %vm2703 = vweird.f32 %v2385
        %v2704 = vand.u32 %v2700, 3
        %vm2705 = vcmp.lt.s32.totalorder %v2704, 2
        %vm2706 = vcmp.eq.s32.totalorder %v2704, 0
        %v2707 = vxor.u32 %v2702, 2147483648
        %v2708 = vsel %vm2706, %v2701, %v2707
        %vm2709 = vcmp.eq.s32.totalorder %v2704, 2
        %v2710 = vxor.u32 %v2701, 2147483648
        %v2711 = vsel %vm2709, %v2710, %v2702
        %v2712 = vsel %vm2705, %v2708, %v2711
        %v2713 = vsel %vm2703, nan, %v2712
        %v2714 = vand.u32 2147483647, %v2386
        %vm2715 = vcmp.le.f32.partialorder %v2714, 0.7853982
        %vm2716 = vcmp.lt.s32.totalorder %v2386, 0
        %v2717 = vand.u32 %v2386, 2139095040
        %v2718 = vshrl.u32 %v2717, 23
        %v2719 = vsub.s32 %v2718, 127
        %v2720 = vand.u32 2147483647, %v2386
        %v2721 = vand.u32 %v2720, 8388607
        %v2722 = vor.u32 %v2721, 8388608
        %v2723 = vsub.s32 0, %v2722
        %v2724 = vadd.s32 %v2719, 1
        %vm2725 = vcmp.gt.s32.totalorder %v2724, 0
        %v2726 = vsel %vm2725, %v2724, 0
        %v2727 = vshrl.u32 %v2726, 5
        %v2728 = vand.u32 %v2726, 31
        %v2729 = vsub.s32 32, %v2728
        %v2730 = vshrl.u32 683565275, %v2729
        %v2731 = vshll.u32 683565275, %v2728
        %v2732 = vshrl.u32 2475754826, %v2729
        %v2733 = vor.u32 %v2731, %v2732
        %v2734 = vshll.u32 2475754826, %v2728
        %v2735 = vshrl.u32 2131351028, %v2729
        %v2736 = vor.u32 %v2734, %v2735
        %v2737 = vshll.u32 2131351028, %v2728
        %v2738 = vshrl.u32 2102212464, %v2729
        %v2739 = vor.u32 %v2737, %v2738
        %v2740 = vshll.u32 2102212464, %v2728
        %v2741 = vshrl.u32 920167782, %v2729
        %v2742 = vor.u32 %v2740, %v2741
        %v2743 = vshll.u32 920167782, %v2728
        %v2744 = vshrl.u32 1326507024, %v2729
        %v2745 = vor.u32 %v2743, %v2744
        %vm2746 = vcmp.lt.s32.totalorder %v2727, 1
        %vm2747 = vcmp.lt.s32.totalorder %v2727, 2
        %vm2748 = vcmp.lt.s32.totalorder %v2727, 3
        %vm2749 = vcmp.lt.s32.totalorder %v2727, 4
        %v2750 = vsel %vm2746, %v2730, %v2733
        %v2751 = vsel %vm2749, %v2739, 2102212464
        %v2752 = vsel %vm2748, %v2736, %v2751
        %v2753 = vsel %vm2747, %v2750, %v2752
        %v2754 = vsel %vm2746, %v2733, %v2736
        %v2755 = vsel %vm2749, %v2742, 920167782
        %v2756 = vsel %vm2748, %v2739, %v2755
        %v2757 = vsel %vm2747, %v2754, %v2756
        %v2758 = vsel %vm2746, %v2736, %v2739
        %v2759 = vsel %vm2749, %v2745, 1326507024
        %v2760 = vsel %vm2748, %v2742, %v2759
        %v2761 = vsel %vm2747, %v2758, %v2760
        %v2762 = vshll.u32 %v2722, 8
        %v2763 = vmul.u32.u64.compose %v2762, %v2761
        %v2764 = vextract.low.u32 %v2763
        %v2765 = vextract.high.u32 %v2763
        %v2766 = vmul.u32.u64.compose %v2762, %v2757
        %v2767 = vextract.low.u32 %v2766
        %v2768 = vextract.high.u32 %v2766
        %v2769 = vmul.u32 %v2762, %v2753
        %v2770 = vadd.s32 %v2765, %v2767
        %vm2771 = vc.u32 %v2765, %v2767
        %v2772 = vadd.s32 %v2768, 1
        %v2773 = vsel %vm2771, %v2772, %v2768
        %v2774 = vadd.s32 %v2769, %v2773
        %v2775 = vadd.s32 %v2774, 536870912
        %v2776 = vshrl.u32 %v2775, 30
        %v2777 = vshll.u32 %v2776, 30
        %v2778 = vsub.s32 %v2774, %v2777
        %vm2779 = vcmp.lt.s32.totalorder %v2778, 0
        %v2780 = vsub.s32 0, %v2778
        %v2781 = vsel %vm2779, %v2780, %v2778
        %v2782 = vclz %v2781
        %v2783 = vsub.s32 %v2782, 2
        %vm2784 = vcmp.gt.s32.totalorder 0, %v2783
        %v2785 = vsel %vm2784, 0, %v2783
        %v2786 = vsub.s32 32, %v2785
        %v2787 = vshll.u32 %v2778, %v2785
        %v2788 = vshrl.u32 %v2770, %v2786
        %v2789 = vor.u32 %v2787, %v2788
        %v2790 = vsub.s32 4294967266, %v2785
        %v2791 = vadd.s32 %v2790, 127
        %v2792 = vshll.u32 %v2791, 23
        %v2793 = vor.u32 4788187, %v2792
        %v2794 = vand.u32 2147483647, %v2793
        %v2796 = vcvt.s32.f32 %v2789
        %v2797 = vmul.f32 %v2796, %v2794
        %v2798 = vxor.u32 %v2797, 2147483648
        %v2799 = vsel %vm2716, %v2798, %v2797
        %v2800 = vsub.s32 4, %v2776
        %v2801 = vsel %vm2716, %v2800, %v2776
        %v2802 = vsel %vm2715, %v2386, %v2799
        %v2803 = vsel %vm2715, 0, %v2801
        %v2804 = vcosq.f32.pop %v2802
        %v2805 = vsinq.f32.pop %v2802
        %vm2806 = vweird.f32 %v2386
        %v2807 = vand.u32 %v2803, 3
        %vm2808 = vcmp.lt.s32.totalorder %v2807, 2
        %vm2809 = vcmp.eq.s32.totalorder %v2807, 0
        %v2810 = vxor.u32 %v2805, 2147483648
        %v2811 = vsel %vm2809, %v2804, %v2810
        %vm2812 = vcmp.eq.s32.totalorder %v2807, 2
        %v2813 = vxor.u32 %v2804, 2147483648
        %v2814 = vsel %vm2812, %v2813, %v2805
        %v2815 = vsel %vm2808, %v2811, %v2814
        %v2816 = vsel %vm2806, nan, %v2815
        %v2819 = vcombine.low %v2713, %v2713
        %v2820 = vcombine.low %v2816, %v2816
        %2823 = vst [vmem:[%s132 + $0x80] sm:$0x70] %v2819
        %2824 = vst [vmem:[%s132 + $0x88] sm:$0x70] %v2713
        %2825 = vst [vmem:[%s132 + $0x90] sm:$0x70] %v2820
        %2826 = vst [vmem:[%s132 + $0x98] sm:$0x70] %v2816
        %s2827 = sand.u32 %s52, 1
        %s2828 = scalar_lea.sflag [#allocation4], %s2827
        %s2829 = sand.u32 %s52, 1
        %s2830 = smul.addr %s2829, 160
        %s2831 = scalar_lea.vmem [#allocation5], %s2830
        // Predicated region
        $region29: #{tpu_custom_call.1} parent=23 // pred_check
          %p2832 = pneg %p62
        $region30: #{tpu_custom_call.1} parent=23 // pred_check_branch
          %2834 = sbr.rel (%p2832) target = $region32
        $region31: #{tpu_custom_call.1} parent=23 // pred_region
          %s2835 = smul.u32 4, %s18
          %s2837 = ssub.s32 2560, 2560
          %2838 = vsyncadd %s2828, %s2837
          %s2839 = smul.addr %s2835, 128
          %s2840 = scalar_lea.hbm %s1, %s2839
          %s2841 = sshll.u32 %s2831, 4
          %s2842 = int_to_ptr.vmem [resolvable:$true] %s2841
          %2847 = dma.vmem_to_hbm [thread:$0]  %s2842, 2560, %s2840, %s2828, 512, 2048, 32
        $region32: #{tpu_custom_call.1} parent=23 // pred_fallthru
          _
      $region24: #{tpu_custom_call.1} parent=5 // pred_fallthru
        _
      %p2848 = scmp.le.s32.totalorder 2, %s13
      // Predicated region
      $region33: #{tpu_custom_call.1} parent=5 // pred_check
        %p2849 = pneg %p2848
      $region34: #{tpu_custom_call.1} parent=5 // pred_check_branch
        %2851 = sbr.rel (%p2849) target = $region36
      $region35: #{tpu_custom_call.1} parent=5 // pred_region
        %s2852 = ssub.s32 %s13, 2
        // Predicated region
        $region37: #{tpu_custom_call.1} parent=35 // pred_check
          %p2853 = pneg %p68
        $region38: #{tpu_custom_call.1} parent=35 // pred_check_branch
          %2855 = sbr.rel (%p2853) target = $region40
        $region39: #{tpu_custom_call.1} parent=35 // pred_region
          %s2856 = sand.u32 %s53, 1
          %s2857 = scalar_lea.sflag [#allocation4], %s2856
          %s2858 = sand.u32 %s53, 1
          %s2859 = smul.addr %s2858, 160
          %s2860 = scalar_lea.vmem [#allocation5], %s2859
          %2861 = dma.done %s2857, 2560
        $region40: #{tpu_custom_call.1} parent=35 // pred_fallthru
          _
      $region36: #{tpu_custom_call.1} parent=5 // pred_fallthru
        _
    $region6: #{tpu_custom_call.1} parent=1 // loop_footer
      %s17 = sadd.s32 1, %s13
    $region7: #{tpu_custom_call.1} parent=1 // loop_footer_branch
      %12 = sbr.rel target = $region3
    $region8: #{tpu_custom_call.1} parent=1 // loop_exit
      _
    %2862 = vsyncpa [#allocation3], 1
    %s2863 = scalar_lea.sflag [#allocation3], 1
    %2864 = vsyncpa %s2863, 1
    %2865 = vsyncpa [#allocation4], 1
    %s2866 = scalar_lea.sflag [#allocation4], 1
    %2867 = vsyncpa %s2866, 1

</llo_original>
